<compile_context>
chip_gen: v7x
topology: tpu7x:2x2x1
jax: 0.10.0
libtpu: 0.0.40
codegen_flags: <defaults>
</compile_context>

<pallas_src>
import jax
import jax.numpy as jnp
import numpy as np
from jax.experimental import pallas as pl
from jax.experimental.pallas import tpu as pltpu

_MM_DTYPE = jnp.bfloat16   # MXU operand dtype (f32 accumulation everywhere)


def _round_up(x, m):
  return ((x + m - 1) // m) * m


def _cdiv(a, b):
  return -(-a // b)


# --------------------------------------------------------------------------
# Kernel
# --------------------------------------------------------------------------
def _readout_setnet_kernel(
    # scalar prefetch
    n_ref,
    # streamed (row-tiled) inputs
    nf_ref, ne_ref,
    # grid-invariant inputs
    sf_ref,
    w1a_ref, w1b_ref, b1_ref, w2_ref, b2_ref, wo_ref,
    fw1_ref, fb1_ref, fw2_ref, fb2_ref,
    fw31a_ref, fb31a_ref, fw32a_ref, fb32a_ref,
    fw31b_ref, fb31b_ref, fw32b_ref, fb32b_ref,
    # outputs
    out_ref,
    # scratch
    w1af_ref, w1bf_ref, b1f_ref, acc_ref,
):
  f32 = jnp.float32
  slice_id = pl.program_id(0)
  j = pl.program_id(1)
  tiles_per_slice = pl.num_programs(1)

  # --- once per slice: SetNet encoder + fold covariate shift into layer1 ---
  @pl.when(j == 0)
  def _init():
    h = jnp.dot(sf_ref[...].astype(fw1_ref.dtype), fw1_ref[...],
                preferred_element_type=f32) + fb1_ref[...]
    h = jnp.maximum(h, 0.0)
    h = jnp.dot(h, fw2_ref[...], preferred_element_type=f32) + fb2_ref[...]
    h = jnp.maximum(h, 0.0)
    mu_a = jnp.dot(h, fw31a_ref[...], preferred_element_type=f32) + fb31a_ref[...]
    mu_b = jnp.dot(h, fw31b_ref[...], preferred_element_type=f32) + fb31b_ref[...]
    std_a = jnp.exp(0.5 * (jnp.dot(h, fw32a_ref[...],
                                   preferred_element_type=f32) + fb32a_ref[...]))
    std_b = jnp.exp(0.5 * (jnp.dot(h, fw32b_ref[...],
                                   preferred_element_type=f32) + fb32b_ref[...]))

    # diag(std) @ W1 without a lane->sublane transpose: build diag via iota.
    a_dim = w1a_ref.shape[0]
    b_dim = w1b_ref.shape[0]
    eye_a = (jax.lax.broadcasted_iota(jnp.int32, (a_dim, a_dim), 0)
             == jax.lax.broadcasted_iota(jnp.int32, (a_dim, a_dim), 1)).astype(f32)
    eye_b = (jax.lax.broadcasted_iota(jnp.int32, (b_dim, b_dim), 0)
             == jax.lax.broadcasted_iota(jnp.int32, (b_dim, b_dim), 1)).astype(f32)
    w1af_ref[...] = jnp.dot(eye_a * std_a, w1a_ref[...],
                            preferred_element_type=f32).astype(w1af_ref.dtype)
    w1bf_ref[...] = jnp.dot(eye_b * std_b, w1b_ref[...],
                            preferred_element_type=f32).astype(w1bf_ref.dtype)
    b1f_ref[...] = (b1_ref[...]
                    + jnp.dot(mu_a, w1a_ref[...], preferred_element_type=f32)
                    + jnp.dot(mu_b, w1b_ref[...], preferred_element_type=f32))
    acc_ref[...] = jnp.zeros_like(acc_ref)

  # --- per-tile readout MLP: bf16 MXU operands, f32 accumulation -----------
  hid = (jnp.dot(nf_ref[...], w1af_ref[...], preferred_element_type=f32)
         + jnp.dot(ne_ref[...], w1bf_ref[...], preferred_element_type=f32)
         + b1f_ref[...])
  hid = jnp.maximum(hid, 0.0)
  gr = jnp.maximum(
      jnp.dot(hid.astype(w2_ref.dtype), w2_ref[...],
              preferred_element_type=f32) + b2_ref[...], 0.0)

  tile_rows = gr.shape[0]
  t = slice_id * tiles_per_slice + j            # global tile index
  n_real = n_ref[0]
  tile_end = (t + 1) * tile_rows

  # Accumulate the per-tile column sum (XLU reduce) into a single-vreg acc.
  # The padding mask only runs on tiles that actually contain padded rows.
  @pl.when(tile_end <= n_real)
  def _acc_full():
    acc_ref[...] += jnp.sum(gr, axis=0, keepdims=True)

  @pl.when(tile_end > n_real)
  def _acc_masked():
    row = jax.lax.broadcasted_iota(jnp.int32, gr.shape, 0) + t * tile_rows
    acc_ref[...] += jnp.sum(jnp.where(row < n_real, gr, 0.0),
                            axis=0, keepdims=True)

  # --- per-slice finalize: one tiny output matmul on the column sums -------
  @pl.when(j == tiles_per_slice - 1)
  def _finalize():
    out_ref[...] = jnp.dot(acc_ref[...], wo_ref[...], preferred_element_type=f32)


# --------------------------------------------------------------------------
# Wrapper
# --------------------------------------------------------------------------
def readout_with_setnet(node_features, node_embeddings, set_feat, kp, *,
                        tile_cap=4096, num_slices=1):
  """Forward pass of Readout_with_SetNet. Returns logits of shape [num_cats].

  num_slices=2 can be used on v7x to shard the row loop across both
  TensorCores (exact: each slice emits a partial column-sum).
  """
  n, attr_dim = node_features.shape
  emb_dim = node_embeddings.shape[1]
  num_cats = kp["num_cats"]

  if n < 1:
    raise ValueError("Readout_with_SetNet: need at least one node "
                     "(mean over zero nodes is undefined).")
  if set_feat.shape[0] != 1:
    raise ValueError("set_feat must have batch size 1 (module's broadcast "
                     "in transform() requires it).")
  if kp["w1a"].shape[0] != attr_dim or kp["w1b"].shape[0] != emb_dim:
    raise ValueError("kernel params were prepared for different "
                     "attr/embedding dims.")
  num_slices = max(1, int(num_slices))

  # Adaptive row tiling: big tiles (cap 4096) to amortize per-step overhead,
  # sized evenly so the trailing tile is not nearly empty.
  rows_per_slice = _cdiv(n, num_slices)
  tiles_per_slice = max(1, _cdiv(rows_per_slice, tile_cap))
  tile_n = _round_up(_cdiv(rows_per_slice, tiles_per_slice), 16)
  n_pad = num_slices * tiles_per_slice * tile_n

  # Stream node data in bf16 (halves HBM bytes; f32 accumulation in-kernel).
  nf = node_features.astype(_MM_DTYPE)
  ne = node_embeddings.astype(_MM_DTYPE)
  if n_pad != n:
    nf = jnp.pad(nf, ((0, n_pad - n), (0, 0)))
    ne = jnp.pad(ne, ((0, n_pad - n), (0, 0)))
  sf = set_feat.astype(jnp.float32)
  n_arr = jnp.array([n], dtype=jnp.int32)

  h_pad = kp["b1"].shape[1]
  o_pad = kp["b2"].shape[1]
  c_pad = kp["wo"].shape[1]

  weight_order = ("w1a", "w1b", "b1", "w2", "b2", "wo",
                  "fw1", "fb1", "fw2", "fb2",
                  "fw31a", "fb31a", "fw32a", "fb32a",
                  "fw31b", "fb31b", "fw32b", "fb32b")
  weights = [kp[name] for name in weight_order]

  def _row_spec(d):
    return pl.BlockSpec((tile_n, d),
                        lambda i, j, n_s: (i * tiles_per_slice + j, 0))

  def _const_spec(arr):
    return pl.BlockSpec(arr.shape, lambda i, j, n_s: (0, 0))

  in_specs = [_row_spec(attr_dim), _row_spec(emb_dim), _const_spec(sf)]
  in_specs += [_const_spec(w) for w in weights]

  partials = pl.pallas_call(
      _readout_setnet_kernel,
      out_shape=jax.ShapeDtypeStruct((num_slices, c_pad), jnp.float32),
      grid_spec=pltpu.PrefetchScalarGridSpec(
          num_scalar_prefetch=1,
          grid=(num_slices, tiles_per_slice),
          in_specs=in_specs,
          out_specs=pl.BlockSpec((1, c_pad), lambda i, j, n_s: (i, 0)),
          scratch_shapes=[
              pltpu.VMEM((attr_dim, h_pad), _MM_DTYPE),   # folded W1a'
              pltpu.VMEM((emb_dim, h_pad), _MM_DTYPE),    # folded W1b'
              pltpu.VMEM((1, h_pad), jnp.float32),        # folded b1'
              pltpu.VMEM((1, o_pad), jnp.float32),        # column-sum acc
          ],
      ),
      compiler_params=pltpu.CompilerParams(
          dimension_semantics=("parallel", "arbitrary")),
  )(n_arr, nf, ne, sf, *weights)

  # Combine per-slice partial column-sums: /N and the output bias (exact,
  # O(num_cats) epilogue needed anyway for the multi-core split).
  logits = partials.sum(axis=0) * (1.0 / n) + kp["bo"][0]
  return logits[:num_cats]


# --------------------------------------------------------------------------
# Parameter construction / preparation
# --------------------------------------------------------------------------
def _init_linear(key, fan_in, fan_out):
  """PyTorch nn.Linear default init U(-1/sqrt(in), 1/sqrt(in)); W is [in, out]."""
  kw, kb = jax.random.split(key)
  bound = 1.0 / (fan_in ** 0.5)
  w = jax.random.uniform(kw, (fan_in, fan_out), jnp.float32, -bound, bound)
  b = jax.random.uniform(kb, (1, fan_out), jnp.float32, -bound, bound)
  return w, b


def make_params(attr_dim, embedding_dim, hidden_dim, output_dim, num_cats, z_dim):
  key = jax.random.PRNGKey(0)
  keys = jax.random.split(key, 7)
  in_dim = attr_dim + embedding_dim
  params = {}
  params["w1"], params["b1"] = _init_linear(keys[0], in_dim, hidden_dim)
  params["w2"], params["b2"] = _init_linear(keys[1], hidden_dim, output_dim)
  params["wo"], params["bo"] = _init_linear(keys[2], output_dim, num_cats)
  params["fw1"], params["fb1"] = _init_linear(keys[3], 1024, 128)
  params["fw2"], params["fb2"] = _init_linear(keys[4], 128, 128)
  params["fw31"], params["fb31"] = _init_linear(keys[5], 128, z_dim)
  params["fw32"], params["fb32"] = _init_linear(keys[6], 128, z_dim)
  return params


def prepare_kernel_params(params, attr_dim, embedding_dim):
  """Split W1 / SetNet heads along the concat boundary, zero-pad small feature
  dims to 128 lanes, and downcast the per-tile matmul weights to bf16."""
  z_dim = params["fw31"].shape[1]
  if z_dim != attr_dim + embedding_dim:
    raise ValueError("attr_dim + embedding_dim must equal z_dim for the "
                     "broadcast in Readout_with_SetNet.transform().")
  hidden = params["w1"].shape[1]
  output = params["w2"].shape[1]
  cats = params["wo"].shape[1]
  h_pad = _round_up(hidden, 128)
  o_pad = _round_up(output, 128)
  c_pad = _round_up(cats, 128)

  def pad2(a, rows, cols):
    return jnp.pad(a, ((0, rows - a.shape[0]), (0, cols - a.shape[1])))

  w1 = params["w1"]
  fw31, fb31 = params["fw31"], params["fb31"]
  fw32, fb32 = params["fw32"], params["fb32"]

  return dict(
      # layer1 halves kept f32 (used once in the fold), layer2 in bf16.
      w1a=pad2(w1[:attr_dim], attr_dim, h_pad),
      w1b=pad2(w1[attr_dim:], embedding_dim, h_pad),
      b1=pad2(params["b1"], 1, h_pad),
      w2=pad2(params["w2"], h_pad, o_pad).astype(_MM_DTYPE),
      b2=pad2(params["b2"], 1, o_pad),
      wo=pad2(params["wo"], o_pad, c_pad),
      bo=pad2(params["bo"], 1, c_pad),
      fw1=params["fw1"].astype(_MM_DTYPE),
      fb1=params["fb1"],
      fw2=params["fw2"],
      fb2=params["fb2"],
      fw31a=fw31[:, :attr_dim], fb31a=fb31[:, :attr_dim],
      fw32a=fw32[:, :attr_dim], fb32a=fb32[:, :attr_dim],
      fw31b=fw31[:, attr_dim:], fb31b=fb31[:, attr_dim:],
      fw32b=fw32[:, attr_dim:], fb32b=fb32[:, attr_dim:],
      num_cats=cats,
  )


# --------------------------------------------------------------------------
# Pure-JAX reference (unfused order; mirrors the kernel's bf16 MXU operands)
# --------------------------------------------------------------------------
def reference_readout(nf, ne, sf, params, *, mm_dtype=_MM_DTYPE):
  f32 = jnp.float32
  comb = jnp.concatenate([nf.astype(f32), ne.astype(f32)], axis=1)
  h = jax.nn.relu(
      jnp.dot(sf.astype(mm_dtype), params["fw1"].astype(mm_dtype),
              preferred_element_type=f32) + params["fb1"])
  h = jax.nn.relu(jnp.dot(h, params["fw2"], preferred_element_type=f32)
                  + params["fb2"])
  mu = jnp.dot(h, params["fw31"], preferred_element_type=f32) + params["fb31"]
  log_var = jnp.dot(h, params["fw32"], preferred_element_type=f32) + params["fb32"]
  std = jnp.exp(0.5 * log_var)
  x = comb * std + mu
  hid = jax.nn.relu(
      jnp.dot(x.astype(mm_dtype), params["w1"].astype(mm_dtype),
              preferred_element_type=f32) + params["b1"])
  gr = jax.nn.relu(
      jnp.dot(hid.astype(mm_dtype), params["w2"].astype(mm_dtype),
              preferred_element_type=f32) + params["b2"])
  logits = jnp.dot(gr, params["wo"], preferred_element_type=f32) + params["bo"]
  return jnp.mean(logits, axis=0)


# --------------------------------------------------------------------------
if __name__ == "__main__":
  # small shapes consistent with the module:
  # attr_dim + embedding_dim must equal z_dim for the broadcast in transform()
  attr_dim = 8
  embedding_dim = 16
  hidden_dim = 32
  output_dim = 16
  num_cats = 4
  z_dim = attr_dim + embedding_dim  # 24

  params = make_params(attr_dim, embedding_dim, hidden_dim, output_dim,
                       num_cats, z_dim)
  kparams = prepare_kernel_params(params, attr_dim, embedding_dim)

  key = jax.random.PRNGKey(0)
  k1, k2, k3, k4, k5 = jax.random.split(key, 5)
  set_feat = jax.random.normal(k3, (1, 1024), jnp.float32)

  # Case 1: tiny graph, single tile / single slice.
  N = 8
  node_features = jax.random.normal(k1, (N, attr_dim), jnp.float32)
  node_embeddings = jax.random.normal(k2, (N, embedding_dim), jnp.float32)
  logits = readout_with_setnet(node_features, node_embeddings, set_feat,
                               kparams)
  jax.block_until_ready(logits)
  assert logits.shape == (num_cats,), logits.shape
  ref = reference_readout(node_features, node_embeddings, set_feat, params)
  np.testing.assert_allclose(np.asarray(logits), np.asarray(ref),
                             rtol=2e-2, atol=2e-2)

  # Case 2: multi-tile + row padding + two parallel slices (v7x dual-TC path).
  N2 = 1000
  nf2 = jax.random.normal(k4, (N2, attr_dim), jnp.float32)
  ne2 = jax.random.normal(k5, (N2, embedding_dim), jnp.float32)
  logits2 = readout_with_setnet(nf2, ne2, set_feat, kparams,
                                tile_cap=256, num_slices=2)
  jax.block_until_ready(logits2)
  ref2 = reference_readout(nf2, ne2, set_feat, params)
  np.testing.assert_allclose(np.asarray(logits2), np.asarray(ref2),
                             rtol=2e-2, atol=2e-2)

  print("KERNEL_OK")
</pallas_src>

<mosaic_0001>
module attributes {stable_mosaic.version = 11 : i64} {
  func.func @_readout_setnet_kernel(%arg0: i32, %arg1: i32, %arg2: memref<1xi32, #tpu.memory_space<smem>>, %arg3: memref<16x8xbf16, #tpu.memory_space<vmem>>, %arg4: memref<16x16xbf16, #tpu.memory_space<vmem>>, %arg5: memref<1x1024xf32, #tpu.memory_space<vmem>>, %arg6: memref<8x128xf32, #tpu.memory_space<vmem>>, %arg7: memref<16x128xf32, #tpu.memory_space<vmem>>, %arg8: memref<1x128xf32, #tpu.memory_space<vmem>>, %arg9: memref<128x128xbf16, #tpu.memory_space<vmem>>, %arg10: memref<1x128xf32, #tpu.memory_space<vmem>>, %arg11: memref<128x128xf32, #tpu.memory_space<vmem>>, %arg12: memref<1024x128xbf16, #tpu.memory_space<vmem>>, %arg13: memref<1x128xf32, #tpu.memory_space<vmem>>, %arg14: memref<128x128xf32, #tpu.memory_space<vmem>>, %arg15: memref<1x128xf32, #tpu.memory_space<vmem>>, %arg16: memref<128x8xf32, #tpu.memory_space<vmem>>, %arg17: memref<1x8xf32, #tpu.memory_space<vmem>>, %arg18: memref<128x8xf32, #tpu.memory_space<vmem>>, %arg19: memref<1x8xf32, #tpu.memory_space<vmem>>, %arg20: memref<128x16xf32, #tpu.memory_space<vmem>>, %arg21: memref<1x16xf32, #tpu.memory_space<vmem>>, %arg22: memref<128x16xf32, #tpu.memory_space<vmem>>, %arg23: memref<1x16xf32, #tpu.memory_space<vmem>>, %arg24: memref<1x128xf32, #tpu.memory_space<vmem>>, %arg25: memref<8x128xbf16, #tpu.memory_space<vmem>>, %arg26: memref<16x128xbf16, #tpu.memory_space<vmem>>, %arg27: memref<1x128xf32, #tpu.memory_space<vmem>>, %arg28: memref<1x128xf32, #tpu.memory_space<vmem>>) attributes {dimension_semantics = [#tpu.dimension_semantics<parallel>, #tpu.dimension_semantics<arbitrary>], iteration_bounds = array<i64: 1, 1>, scalar_prefetch = 1 : i64, scratch_operands = 4 : i64, tpu.core_type = #tpu.core_type<tc>, window_params = [{transform_indices = @transform_0, window_bounds = array<i64: 16, 8>}, {transform_indices = @transform_1, window_bounds = array<i64: 16, 16>}, {pipeline_mode = #tpu.pipeline_mode<synchronous>, transform_indices = @transform_2, window_bounds = array<i64: 1, 1024>}, {pipeline_mode = #tpu.pipeline_mode<synchronous>, transform_indices = @transform_3, window_bounds = array<i64: 8, 128>}, {pipeline_mode = #tpu.pipeline_mode<synchronous>, transform_indices = @transform_4, window_bounds = array<i64: 16, 128>}, {pipeline_mode = #tpu.pipeline_mode<synchronous>, transform_indices = @transform_5, window_bounds = array<i64: 1, 128>}, {pipeline_mode = #tpu.pipeline_mode<synchronous>, transform_indices = @transform_6, window_bounds = array<i64: 128, 128>}, {pipeline_mode = #tpu.pipeline_mode<synchronous>, transform_indices = @transform_7, window_bounds = array<i64: 1, 128>}, {pipeline_mode = #tpu.pipeline_mode<synchronous>, transform_indices = @transform_8, window_bounds = array<i64: 128, 128>}, {pipeline_mode = #tpu.pipeline_mode<synchronous>, transform_indices = @transform_9, window_bounds = array<i64: 1024, 128>}, {pipeline_mode = #tpu.pipeline_mode<synchronous>, transform_indices = @transform_10, window_bounds = array<i64: 1, 128>}, {pipeline_mode = #tpu.pipeline_mode<synchronous>, transform_indices = @transform_11, window_bounds = array<i64: 128, 128>}, {pipeline_mode = #tpu.pipeline_mode<synchronous>, transform_indices = @transform_12, window_bounds = array<i64: 1, 128>}, {pipeline_mode = #tpu.pipeline_mode<synchronous>, transform_indices = @transform_13, window_bounds = array<i64: 128, 8>}, {pipeline_mode = #tpu.pipeline_mode<synchronous>, transform_indices = @transform_14, window_bounds = array<i64: 1, 8>}, {pipeline_mode = #tpu.pipeline_mode<synchronous>, transform_indices = @transform_15, window_bounds = array<i64: 128, 8>}, {pipeline_mode = #tpu.pipeline_mode<synchronous>, transform_indices = @transform_16, window_bounds = array<i64: 1, 8>}, {pipeline_mode = #tpu.pipeline_mode<synchronous>, transform_indices = @transform_17, window_bounds = array<i64: 128, 16>}, {pipeline_mode = #tpu.pipeline_mode<synchronous>, transform_indices = @transform_18, window_bounds = array<i64: 1, 16>}, {pipeline_mode = #tpu.pipeline_mode<synchronous>, transform_indices = @transform_19, window_bounds = array<i64: 128, 16>}, {pipeline_mode = #tpu.pipeline_mode<synchronous>, transform_indices = @transform_20, window_bounds = array<i64: 1, 16>}, {transform_indices = @transform_21, window_bounds = array<i64: 1, 128>}]} {
    %c0_i32 = arith.constant 0 : i32
    %0 = arith.cmpi eq, %arg1, %c0_i32 : i32
    %1 = arith.extui %0 : i1 to i32
    %c0_i32_0 = arith.constant 0 : i32
    %2 = arith.cmpi ne, %1, %c0_i32_0 : i32
    scf.if %2 {
      %c0_24 = arith.constant 0 : index
      %c0_25 = arith.constant 0 : index
      %37 = vector.load %arg5[%c0_24, %c0_25] : memref<1x1024xf32, #tpu.memory_space<vmem>>, vector<1x1024xf32>
      %38 = arith.truncf %37 : vector<1x1024xf32> to vector<1x1024xbf16>
      %c0_26 = arith.constant 0 : index
      %c0_27 = arith.constant 0 : index
      %39 = vector.load %arg12[%c0_26, %c0_27] : memref<1024x128xbf16, #tpu.memory_space<vmem>>, vector<1024x128xbf16>
      %cst_28 = arith.constant dense<0.000000e+00> : vector<1x128xf32>
      %40 = tpu.matmul %38, %39, %cst_28 {dimension_numbers = #tpu.dot_dimension_numbers<[1], [0], [0], [1], [0, 0, 1, 1], [], []>} : vector<1x1024xbf16>, vector<1024x128xbf16>, vector<1x128xf32> -> vector<1x128xf32>
      %c0_29 = arith.constant 0 : index
      %c0_30 = arith.constant 0 : index
      %41 = vector.load %arg13[%c0_29, %c0_30] : memref<1x128xf32, #tpu.memory_space<vmem>>, vector<1x128xf32>
      %42 = arith.addf %40, %41 : vector<1x128xf32>
      %cst_31 = arith.constant 0.000000e+00 : f32
      %43 = vector.broadcast %cst_31 : f32 to vector<1x128xf32>
      %44 = arith.maximumf %42, %43 : vector<1x128xf32>
      %c0_32 = arith.constant 0 : index
      %c0_33 = arith.constant 0 : index
      %45 = vector.load %arg14[%c0_32, %c0_33] : memref<128x128xf32, #tpu.memory_space<vmem>>, vector<128x128xf32>
      %cst_34 = arith.constant dense<0.000000e+00> : vector<1x128xf32>
      %46 = tpu.matmul %44, %45, %cst_34 {dimension_numbers = #tpu.dot_dimension_numbers<[1], [0], [0], [1], [0, 0, 1, 1], [], []>} : vector<1x128xf32>, vector<128x128xf32>, vector<1x128xf32> -> vector<1x128xf32>
      %c0_35 = arith.constant 0 : index
      %c0_36 = arith.constant 0 : index
      %47 = vector.load %arg15[%c0_35, %c0_36] : memref<1x128xf32, #tpu.memory_space<vmem>>, vector<1x128xf32>
      %48 = arith.addf %46, %47 : vector<1x128xf32>
      %cst_37 = arith.constant 0.000000e+00 : f32
      %49 = vector.broadcast %cst_37 : f32 to vector<1x128xf32>
      %50 = arith.maximumf %48, %49 : vector<1x128xf32>
      %c0_38 = arith.constant 0 : index
      %c0_39 = arith.constant 0 : index
      %51 = vector.load %arg16[%c0_38, %c0_39] : memref<128x8xf32, #tpu.memory_space<vmem>>, vector<128x8xf32>
      %cst_40 = arith.constant dense<0.000000e+00> : vector<1x8xf32>
      %52 = tpu.matmul %50, %51, %cst_40 {dimension_numbers = #tpu.dot_dimension_numbers<[1], [0], [0], [1], [0, 0, 1, 1], [], []>} : vector<1x128xf32>, vector<128x8xf32>, vector<1x8xf32> -> vector<1x8xf32>
      %c0_41 = arith.constant 0 : index
      %c0_42 = arith.constant 0 : index
      %53 = vector.load %arg17[%c0_41, %c0_42] : memref<1x8xf32, #tpu.memory_space<vmem>>, vector<1x8xf32>
      %54 = arith.addf %52, %53 : vector<1x8xf32>
      %c0_43 = arith.constant 0 : index
      %c0_44 = arith.constant 0 : index
      %55 = vector.load %arg20[%c0_43, %c0_44] : memref<128x16xf32, #tpu.memory_space<vmem>>, vector<128x16xf32>
      %cst_45 = arith.constant dense<0.000000e+00> : vector<1x16xf32>
      %56 = tpu.matmul %50, %55, %cst_45 {dimension_numbers = #tpu.dot_dimension_numbers<[1], [0], [0], [1], [0, 0, 1, 1], [], []>} : vector<1x128xf32>, vector<128x16xf32>, vector<1x16xf32> -> vector<1x16xf32>
      %c0_46 = arith.constant 0 : index
      %c0_47 = arith.constant 0 : index
      %57 = vector.load %arg21[%c0_46, %c0_47] : memref<1x16xf32, #tpu.memory_space<vmem>>, vector<1x16xf32>
      %58 = arith.addf %56, %57 : vector<1x16xf32>
      %c0_48 = arith.constant 0 : index
      %c0_49 = arith.constant 0 : index
      %59 = vector.load %arg18[%c0_48, %c0_49] : memref<128x8xf32, #tpu.memory_space<vmem>>, vector<128x8xf32>
      %cst_50 = arith.constant dense<0.000000e+00> : vector<1x8xf32>
      %60 = tpu.matmul %50, %59, %cst_50 {dimension_numbers = #tpu.dot_dimension_numbers<[1], [0], [0], [1], [0, 0, 1, 1], [], []>} : vector<1x128xf32>, vector<128x8xf32>, vector<1x8xf32> -> vector<1x8xf32>
      %c0_51 = arith.constant 0 : index
      %c0_52 = arith.constant 0 : index
      %61 = vector.load %arg19[%c0_51, %c0_52] : memref<1x8xf32, #tpu.memory_space<vmem>>, vector<1x8xf32>
      %62 = arith.addf %60, %61 : vector<1x8xf32>
      %cst_53 = arith.constant 5.000000e-01 : f32
      %63 = vector.broadcast %cst_53 : f32 to vector<1x8xf32>
      %64 = arith.mulf %63, %62 : vector<1x8xf32>
      %65 = math.exp %64 : vector<1x8xf32>
      %c0_54 = arith.constant 0 : index
      %c0_55 = arith.constant 0 : index
      %66 = vector.load %arg22[%c0_54, %c0_55] : memref<128x16xf32, #tpu.memory_space<vmem>>, vector<128x16xf32>
      %cst_56 = arith.constant dense<0.000000e+00> : vector<1x16xf32>
      %67 = tpu.matmul %50, %66, %cst_56 {dimension_numbers = #tpu.dot_dimension_numbers<[1], [0], [0], [1], [0, 0, 1, 1], [], []>} : vector<1x128xf32>, vector<128x16xf32>, vector<1x16xf32> -> vector<1x16xf32>
      %c0_57 = arith.constant 0 : index
      %c0_58 = arith.constant 0 : index
      %68 = vector.load %arg23[%c0_57, %c0_58] : memref<1x16xf32, #tpu.memory_space<vmem>>, vector<1x16xf32>
      %69 = arith.addf %67, %68 : vector<1x16xf32>
      %cst_59 = arith.constant 5.000000e-01 : f32
      %70 = vector.broadcast %cst_59 : f32 to vector<1x16xf32>
      %71 = arith.mulf %70, %69 : vector<1x16xf32>
      %72 = math.exp %71 : vector<1x16xf32>
      %73 = tpu.iota {dimensions = array<i32: 0>} : vector<8x8xi32>
      %74 = tpu.iota {dimensions = array<i32: 1>} : vector<8x8xi32>
      %75 = arith.cmpi eq, %73, %74 : vector<8x8xi32>
      %76 = arith.extui %75 : vector<8x8xi1> to vector<8x8xi32>
      %77 = arith.sitofp %76 : vector<8x8xi32> to vector<8x8xf32>
      %78 = tpu.iota {dimensions = array<i32: 0>} : vector<16x16xi32>
      %79 = tpu.iota {dimensions = array<i32: 1>} : vector<16x16xi32>
      %80 = arith.cmpi eq, %78, %79 : vector<16x16xi32>
      %81 = arith.extui %80 : vector<16x16xi1> to vector<16x16xi32>
      %82 = arith.sitofp %81 : vector<16x16xi32> to vector<16x16xf32>
      %83 = vector.broadcast %65 : vector<1x8xf32> to vector<8x8xf32>
      %84 = arith.mulf %77, %83 : vector<8x8xf32>
      %c0_60 = arith.constant 0 : index
      %c0_61 = arith.constant 0 : index
      %85 = vector.load %arg6[%c0_60, %c0_61] : memref<8x128xf32, #tpu.memory_space<vmem>>, vector<8x128xf32>
      %cst_62 = arith.constant dense<0.000000e+00> : vector<8x128xf32>
      %86 = tpu.matmul %84, %85, %cst_62 {dimension_numbers = #tpu.dot_dimension_numbers<[1], [0], [0], [1], [0, 0, 1, 1], [], []>} : vector<8x8xf32>, vector<8x128xf32>, vector<8x128xf32> -> vector<8x128xf32>
      %87 = arith.truncf %86 : vector<8x128xf32> to vector<8x128xbf16>
      %c0_63 = arith.constant 0 : index
      %c0_64 = arith.constant 0 : index
      %88 = vector.load %arg25[%c0_63, %c0_64] : memref<8x128xbf16, #tpu.memory_space<vmem>>, vector<8x128xbf16>
      tpu.vector_store %arg25[%c0_63, %c0_64], %87 {strides = array<i32>} : memref<8x128xbf16, #tpu.memory_space<vmem>>, vector<8x128xbf16>,
      %89 = vector.broadcast %72 : vector<1x16xf32> to vector<16x16xf32>
      %90 = arith.mulf %82, %89 : vector<16x16xf32>
      %c0_65 = arith.constant 0 : index
      %c0_66 = arith.constant 0 : index
      %91 = vector.load %arg7[%c0_65, %c0_66] : memref<16x128xf32, #tpu.memory_space<vmem>>, vector<16x128xf32>
      %cst_67 = arith.constant dense<0.000000e+00> : vector<16x128xf32>
      %92 = tpu.matmul %90, %91, %cst_67 {dimension_numbers = #tpu.dot_dimension_numbers<[1], [0], [0], [1], [0, 0, 1, 1], [], []>} : vector<16x16xf32>, vector<16x128xf32>, vector<16x128xf32> -> vector<16x128xf32>
      %93 = arith.truncf %92 : vector<16x128xf32> to vector<16x128xbf16>
      %c0_68 = arith.constant 0 : index
      %c0_69 = arith.constant 0 : index
      %94 = vector.load %arg26[%c0_68, %c0_69] : memref<16x128xbf16, #tpu.memory_space<vmem>>, vector<16x128xbf16>
      tpu.vector_store %arg26[%c0_68, %c0_69], %93 {strides = array<i32>} : memref<16x128xbf16, #tpu.memory_space<vmem>>, vector<16x128xbf16>,
      %c0_70 = arith.constant 0 : index
      %c0_71 = arith.constant 0 : index
      %95 = vector.load %arg8[%c0_70, %c0_71] : memref<1x128xf32, #tpu.memory_space<vmem>>, vector<1x128xf32>
      %c0_72 = arith.constant 0 : index
      %c0_73 = arith.constant 0 : index
      %96 = vector.load %arg6[%c0_72, %c0_73] : memref<8x128xf32, #tpu.memory_space<vmem>>, vector<8x128xf32>
      %cst_74 = arith.constant dense<0.000000e+00> : vector<1x128xf32>
      %97 = tpu.matmul %54, %96, %cst_74 {dimension_numbers = #tpu.dot_dimension_numbers<[1], [0], [0], [1], [0, 0, 1, 1], [], []>} : vector<1x8xf32>, vector<8x128xf32>, vector<1x128xf32> -> vector<1x128xf32>
      %98 = arith.addf %95, %97 : vector<1x128xf32>
      %c0_75 = arith.constant 0 : index
      %c0_76 = arith.constant 0 : index
      %99 = vector.load %arg7[%c0_75, %c0_76] : memref<16x128xf32, #tpu.memory_space<vmem>>, vector<16x128xf32>
      %cst_77 = arith.constant dense<0.000000e+00> : vector<1x128xf32>
      %100 = tpu.matmul %58, %99, %cst_77 {dimension_numbers = #tpu.dot_dimension_numbers<[1], [0], [0], [1], [0, 0, 1, 1], [], []>} : vector<1x16xf32>, vector<16x128xf32>, vector<1x128xf32> -> vector<1x128xf32>
      %101 = arith.addf %98, %100 : vector<1x128xf32>
      %c0_78 = arith.constant 0 : index
      %c0_79 = arith.constant 0 : index
      %102 = vector.load %arg27[%c0_78, %c0_79] : memref<1x128xf32, #tpu.memory_space<vmem>>, vector<1x128xf32>
      tpu.vector_store %arg27[%c0_78, %c0_79], %101 {strides = array<i32>} : memref<1x128xf32, #tpu.memory_space<vmem>>, vector<1x128xf32>,
      %cst_80 = arith.constant 0.000000e+00 : f32
      %103 = vector.broadcast %cst_80 : f32 to vector<1x128xf32>
      %c0_81 = arith.constant 0 : index
      %c0_82 = arith.constant 0 : index
      %104 = vector.load %arg28[%c0_81, %c0_82] : memref<1x128xf32, #tpu.memory_space<vmem>>, vector<1x128xf32>
      tpu.vector_store %arg28[%c0_81, %c0_82], %103 {strides = array<i32>} : memref<1x128xf32, #tpu.memory_space<vmem>>, vector<1x128xf32>,
    } else {
    }
    %c0 = arith.constant 0 : index
    %c0_1 = arith.constant 0 : index
    %3 = vector.load %arg3[%c0, %c0_1] : memref<16x8xbf16, #tpu.memory_space<vmem>>, vector<16x8xbf16>
    %c0_2 = arith.constant 0 : index
    %c0_3 = arith.constant 0 : index
    %4 = vector.load %arg25[%c0_2, %c0_3] : memref<8x128xbf16, #tpu.memory_space<vmem>>, vector<8x128xbf16>
    %cst = arith.constant dense<0.000000e+00> : vector<16x128xf32>
    %5 = tpu.matmul %3, %4, %cst {dimension_numbers = #tpu.dot_dimension_numbers<[1], [0], [0], [1], [0, 0, 1, 1], [], []>} : vector<16x8xbf16>, vector<8x128xbf16>, vector<16x128xf32> -> vector<16x128xf32>
    %c0_4 = arith.constant 0 : index
    %c0_5 = arith.constant 0 : index
    %6 = vector.load %arg4[%c0_4, %c0_5] : memref<16x16xbf16, #tpu.memory_space<vmem>>, vector<16x16xbf16>
    %c0_6 = arith.constant 0 : index
    %c0_7 = arith.constant 0 : index
    %7 = vector.load %arg26[%c0_6, %c0_7] : memref<16x128xbf16, #tpu.memory_space<vmem>>, vector<16x128xbf16>
    %cst_8 = arith.constant dense<0.000000e+00> : vector<16x128xf32>
    %8 = tpu.matmul %6, %7, %cst_8 {dimension_numbers = #tpu.dot_dimension_numbers<[1], [0], [0], [1], [0, 0, 1, 1], [], []>} : vector<16x16xbf16>, vector<16x128xbf16>, vector<16x128xf32> -> vector<16x128xf32>
    %9 = arith.addf %5, %8 : vector<16x128xf32>
    %c0_9 = arith.constant 0 : index
    %c0_10 = arith.constant 0 : index
    %10 = vector.load %arg27[%c0_9, %c0_10] : memref<1x128xf32, #tpu.memory_space<vmem>>, vector<1x128xf32>
    %11 = vector.broadcast %10 : vector<1x128xf32> to vector<16x128xf32>
    %12 = arith.addf %9, %11 : vector<16x128xf32>
    %cst_11 = arith.constant 0.000000e+00 : f32
    %13 = vector.broadcast %cst_11 : f32 to vector<16x128xf32>
    %14 = arith.maximumf %12, %13 : vector<16x128xf32>
    %15 = arith.truncf %14 : vector<16x128xf32> to vector<16x128xbf16>
    %c0_12 = arith.constant 0 : index
    %c0_13 = arith.constant 0 : index
    %16 = vector.load %arg9[%c0_12, %c0_13] : memref<128x128xbf16, #tpu.memory_space<vmem>>, vector<128x128xbf16>
    %cst_14 = arith.constant dense<0.000000e+00> : vector<16x128xf32>
    %17 = tpu.matmul %15, %16, %cst_14 {dimension_numbers = #tpu.dot_dimension_numbers<[1], [0], [0], [1], [0, 0, 1, 1], [], []>} : vector<16x128xbf16>, vector<128x128xbf16>, vector<16x128xf32> -> vector<16x128xf32>
    %c0_15 = arith.constant 0 : index
    %c0_16 = arith.constant 0 : index
    %18 = vector.load %arg10[%c0_15, %c0_16] : memref<1x128xf32, #tpu.memory_space<vmem>>, vector<1x128xf32>
    %19 = vector.broadcast %18 : vector<1x128xf32> to vector<16x128xf32>
    %20 = arith.addf %17, %19 : vector<16x128xf32>
    %cst_17 = arith.constant 0.000000e+00 : f32
    %21 = vector.broadcast %cst_17 : f32 to vector<16x128xf32>
    %22 = arith.maximumf %20, %21 : vector<16x128xf32>
    %c1_i32 = arith.constant 1 : i32
    %23 = arith.muli %arg0, %c1_i32 : i32
    %24 = arith.addi %23, %arg1 : i32
    %c0_18 = arith.constant 0 : index
    %25 = memref.load %arg2[%c0_18] : memref<1xi32, #tpu.memory_space<smem>>
    %c1_i32_19 = arith.constant 1 : i32
    %26 = arith.addi %24, %c1_i32_19 : i32
    %c16_i32 = arith.constant 16 : i32
    %27 = arith.muli %26, %c16_i32 : i32
    %28 = arith.cmpi sle, %27, %25 : i32
    %29 = arith.extui %28 : i1 to i32
    %c0_i32_20 = arith.constant 0 : i32
    %30 = arith.cmpi ne, %29, %c0_i32_20 : i32
    scf.if %30 {
      %c0_24 = arith.constant 0 : index
      %c0_25 = arith.constant 0 : index
      %37 = vector.load %arg28[%c0_24, %c0_25] : memref<1x128xf32, #tpu.memory_space<vmem>>, vector<1x128xf32>
      %cst_26 = arith.constant dense<0.000000e+00> : vector<128xf32>
      %38 = vector.multi_reduction <add>, %22, %cst_26 [0] : vector<16x128xf32> to vector<128xf32>
      %39 = vector.shape_cast %38 : vector<128xf32> to vector<1x128xf32>
      %40 = arith.addf %37, %39 : vector<1x128xf32>
      %c0_27 = arith.constant 0 : index
      %c0_28 = arith.constant 0 : index
      %41 = vector.load %arg28[%c0_27, %c0_28] : memref<1x128xf32, #tpu.memory_space<vmem>>, vector<1x128xf32>
      tpu.vector_store %arg28[%c0_27, %c0_28], %40 {strides = array<i32>} : memref<1x128xf32, #tpu.memory_space<vmem>>, vector<1x128xf32>,
    } else {
    }
    %31 = arith.cmpi sgt, %27, %25 : i32
    %32 = arith.extui %31 : i1 to i32
    %c0_i32_21 = arith.constant 0 : i32
    %33 = arith.cmpi ne, %32, %c0_i32_21 : i32
    scf.if %33 {
      %37 = tpu.iota {dimensions = array<i32: 0>} : vector<16x128xi32>
      %c16_i32_24 = arith.constant 16 : i32
      %38 = arith.muli %24, %c16_i32_24 : i32
      %39 = vector.broadcast %38 : i32 to vector<16x128xi32>
      %40 = arith.addi %37, %39 : vector<16x128xi32>
      %c0_25 = arith.constant 0 : index
      %c0_26 = arith.constant 0 : index
      %41 = vector.load %arg28[%c0_25, %c0_26] : memref<1x128xf32, #tpu.memory_space<vmem>>, vector<1x128xf32>
      %42 = vector.broadcast %25 : i32 to vector<16x128xi32>
      %43 = arith.cmpi slt, %40, %42 : vector<16x128xi32>
      %cst_27 = arith.constant 0.000000e+00 : f32
      %44 = vector.broadcast %cst_27 : f32 to vector<16x128xf32>
      %45 = arith.select %43, %22, %44 : vector<16x128xi1>, vector<16x128xf32>
      %cst_28 = arith.constant dense<0.000000e+00> : vector<128xf32>
      %46 = vector.multi_reduction <add>, %45, %cst_28 [0] : vector<16x128xf32> to vector<128xf32>
      %47 = vector.shape_cast %46 : vector<128xf32> to vector<1x128xf32>
      %48 = arith.addf %41, %47 : vector<1x128xf32>
      %c0_29 = arith.constant 0 : index
      %c0_30 = arith.constant 0 : index
      %49 = vector.load %arg28[%c0_29, %c0_30] : memref<1x128xf32, #tpu.memory_space<vmem>>, vector<1x128xf32>
      tpu.vector_store %arg28[%c0_29, %c0_30], %48 {strides = array<i32>} : memref<1x128xf32, #tpu.memory_space<vmem>>, vector<1x128xf32>,
    } else {
    }
    %c0_i32_22 = arith.constant 0 : i32
    %34 = arith.cmpi eq, %arg1, %c0_i32_22 : i32
    %35 = arith.extui %34 : i1 to i32
    %c0_i32_23 = arith.constant 0 : i32
    %36 = arith.cmpi ne, %35, %c0_i32_23 : i32
    scf.if %36 {
      %c0_24 = arith.constant 0 : index
      %c0_25 = arith.constant 0 : index
      %37 = vector.load %arg28[%c0_24, %c0_25] : memref<1x128xf32, #tpu.memory_space<vmem>>, vector<1x128xf32>
      %c0_26 = arith.constant 0 : index
      %c0_27 = arith.constant 0 : index
      %38 = vector.load %arg11[%c0_26, %c0_27] : memref<128x128xf32, #tpu.memory_space<vmem>>, vector<128x128xf32>
      %cst_28 = arith.constant dense<0.000000e+00> : vector<1x128xf32>
      %39 = tpu.matmul %37, %38, %cst_28 {dimension_numbers = #tpu.dot_dimension_numbers<[1], [0], [0], [1], [0, 0, 1, 1], [], []>} : vector<1x128xf32>, vector<128x128xf32>, vector<1x128xf32> -> vector<1x128xf32>
      %c0_29 = arith.constant 0 : index
      %c0_30 = arith.constant 0 : index
      %40 = vector.load %arg24[%c0_29, %c0_30] : memref<1x128xf32, #tpu.memory_space<vmem>>, vector<1x128xf32>
      tpu.vector_store %arg24[%c0_29, %c0_30], %39 {strides = array<i32>} : memref<1x128xf32, #tpu.memory_space<vmem>>, vector<1x128xf32>,
    } else {
    }
    return
  }
  func.func @transform_0(%arg0: i32, %arg1: i32, %arg2: memref<1xi32, #tpu.memory_space<smem>>) -> (i32, i32) {
    %c1_i32 = arith.constant 1 : i32
    %0 = arith.muli %arg0, %c1_i32 : i32
    %1 = arith.addi %0, %arg1 : i32
    %c0_i32 = arith.constant 0 : i32
    %c0_i32_0 = arith.constant 0 : i32
    return %1, %c0_i32 : i32, i32
  }
  func.func @transform_1(%arg0: i32, %arg1: i32, %arg2: memref<1xi32, #tpu.memory_space<smem>>) -> (i32, i32) {
    %c1_i32 = arith.constant 1 : i32
    %0 = arith.muli %arg0, %c1_i32 : i32
    %1 = arith.addi %0, %arg1 : i32
    %c0_i32 = arith.constant 0 : i32
    %c0_i32_0 = arith.constant 0 : i32
    return %1, %c0_i32 : i32, i32
  }
  func.func @transform_2(%arg0: i32, %arg1: i32, %arg2: memref<1xi32, #tpu.memory_space<smem>>) -> (i32, i32) {
    %c0_i32 = arith.constant 0 : i32
    %c0_i32_0 = arith.constant 0 : i32
    %c0_i32_1 = arith.constant 0 : i32
    return %c0_i32, %c0_i32_0 : i32, i32
  }
  func.func @transform_3(%arg0: i32, %arg1: i32, %arg2: memref<1xi32, #tpu.memory_space<smem>>) -> (i32, i32) {
    %c0_i32 = arith.constant 0 : i32
    %c0_i32_0 = arith.constant 0 : i32
    %c0_i32_1 = arith.constant 0 : i32
    return %c0_i32, %c0_i32_0 : i32, i32
  }
  func.func @transform_4(%arg0: i32, %arg1: i32, %arg2: memref<1xi32, #tpu.memory_space<smem>>) -> (i32, i32) {
    %c0_i32 = arith.constant 0 : i32
    %c0_i32_0 = arith.constant 0 : i32
    %c0_i32_1 = arith.constant 0 : i32
    return %c0_i32, %c0_i32_0 : i32, i32
  }
  func.func @transform_5(%arg0: i32, %arg1: i32, %arg2: memref<1xi32, #tpu.memory_space<smem>>) -> (i32, i32) {
    %c0_i32 = arith.constant 0 : i32
    %c0_i32_0 = arith.constant 0 : i32
    %c0_i32_1 = arith.constant 0 : i32
    return %c0_i32, %c0_i32_0 : i32, i32
  }
  func.func @transform_6(%arg0: i32, %arg1: i32, %arg2: memref<1xi32, #tpu.memory_space<smem>>) -> (i32, i32) {
    %c0_i32 = arith.constant 0 : i32
    %c0_i32_0 = arith.constant 0 : i32
    %c0_i32_1 = arith.constant 0 : i32
    return %c0_i32, %c0_i32_0 : i32, i32
  }
  func.func @transform_7(%arg0: i32, %arg1: i32, %arg2: memref<1xi32, #tpu.memory_space<smem>>) -> (i32, i32) {
    %c0_i32 = arith.constant 0 : i32
    %c0_i32_0 = arith.constant 0 : i32
    %c0_i32_1 = arith.constant 0 : i32
    return %c0_i32, %c0_i32_0 : i32, i32
  }
  func.func @transform_8(%arg0: i32, %arg1: i32, %arg2: memref<1xi32, #tpu.memory_space<smem>>) -> (i32, i32) {
    %c0_i32 = arith.constant 0 : i32
    %c0_i32_0 = arith.constant 0 : i32
    %c0_i32_1 = arith.constant 0 : i32
    return %c0_i32, %c0_i32_0 : i32, i32
  }
  func.func @transform_9(%arg0: i32, %arg1: i32, %arg2: memref<1xi32, #tpu.memory_space<smem>>) -> (i32, i32) {
    %c0_i32 = arith.constant 0 : i32
    %c0_i32_0 = arith.constant 0 : i32
    %c0_i32_1 = arith.constant 0 : i32
    return %c0_i32, %c0_i32_0 : i32, i32
  }
  func.func @transform_10(%arg0: i32, %arg1: i32, %arg2: memref<1xi32, #tpu.memory_space<smem>>) -> (i32, i32) {
    %c0_i32 = arith.constant 0 : i32
    %c0_i32_0 = arith.constant 0 : i32
    %c0_i32_1 = arith.constant 0 : i32
    return %c0_i32, %c0_i32_0 : i32, i32
  }
  func.func @transform_11(%arg0: i32, %arg1: i32, %arg2: memref<1xi32, #tpu.memory_space<smem>>) -> (i32, i32) {
    %c0_i32 = arith.constant 0 : i32
    %c0_i32_0 = arith.constant 0 : i32
    %c0_i32_1 = arith.constant 0 : i32
    return %c0_i32, %c0_i32_0 : i32, i32
  }
  func.func @transform_12(%arg0: i32, %arg1: i32, %arg2: memref<1xi32, #tpu.memory_space<smem>>) -> (i32, i32) {
    %c0_i32 = arith.constant 0 : i32
    %c0_i32_0 = arith.constant 0 : i32
    %c0_i32_1 = arith.constant 0 : i32
    return %c0_i32, %c0_i32_0 : i32, i32
  }
  func.func @transform_13(%arg0: i32, %arg1: i32, %arg2: memref<1xi32, #tpu.memory_space<smem>>) -> (i32, i32) {
    %c0_i32 = arith.constant 0 : i32
    %c0_i32_0 = arith.constant 0 : i32
    %c0_i32_1 = arith.constant 0 : i32
    return %c0_i32, %c0_i32_0 : i32, i32
  }
  func.func @transform_14(%arg0: i32, %arg1: i32, %arg2: memref<1xi32, #tpu.memory_space<smem>>) -> (i32, i32) {
    %c0_i32 = arith.constant 0 : i32
    %c0_i32_0 = arith.constant 0 : i32
    %c0_i32_1 = arith.constant 0 : i32
    return %c0_i32, %c0_i32_0 : i32, i32
  }
  func.func @transform_15(%arg0: i32, %arg1: i32, %arg2: memref<1xi32, #tpu.memory_space<smem>>) -> (i32, i32) {
    %c0_i32 = arith.constant 0 : i32
    %c0_i32_0 = arith.constant 0 : i32
    %c0_i32_1 = arith.constant 0 : i32
    return %c0_i32, %c0_i32_0 : i32, i32
  }
  func.func @transform_16(%arg0: i32, %arg1: i32, %arg2: memref<1xi32, #tpu.memory_space<smem>>) -> (i32, i32) {
    %c0_i32 = arith.constant 0 : i32
    %c0_i32_0 = arith.constant 0 : i32
    %c0_i32_1 = arith.constant 0 : i32
    return %c0_i32, %c0_i32_0 : i32, i32
  }
  func.func @transform_17(%arg0: i32, %arg1: i32, %arg2: memref<1xi32, #tpu.memory_space<smem>>) -> (i32, i32) {
    %c0_i32 = arith.constant 0 : i32
    %c0_i32_0 = arith.constant 0 : i32
    %c0_i32_1 = arith.constant 0 : i32
    return %c0_i32, %c0_i32_0 : i32, i32
  }
  func.func @transform_18(%arg0: i32, %arg1: i32, %arg2: memref<1xi32, #tpu.memory_space<smem>>) -> (i32, i32) {
    %c0_i32 = arith.constant 0 : i32
    %c0_i32_0 = arith.constant 0 : i32
    %c0_i32_1 = arith.constant 0 : i32
    return %c0_i32, %c0_i32_0 : i32, i32
  }
  func.func @transform_19(%arg0: i32, %arg1: i32, %arg2: memref<1xi32, #tpu.memory_space<smem>>) -> (i32, i32) {
    %c0_i32 = arith.constant 0 : i32
    %c0_i32_0 = arith.constant 0 : i32
    %c0_i32_1 = arith.constant 0 : i32
    return %c0_i32, %c0_i32_0 : i32, i32
  }
  func.func @transform_20(%arg0: i32, %arg1: i32, %arg2: memref<1xi32, #tpu.memory_space<smem>>) -> (i32, i32) {
    %c0_i32 = arith.constant 0 : i32
    %c0_i32_0 = arith.constant 0 : i32
    %c0_i32_1 = arith.constant 0 : i32
    return %c0_i32, %c0_i32_0 : i32, i32
  }
  func.func @transform_21(%arg0: i32, %arg1: i32, %arg2: memref<1xi32, #tpu.memory_space<smem>>) -> (i32, i32) {
    %c0_i32 = arith.constant 0 : i32
    %c0_i32_0 = arith.constant 0 : i32
    return %arg0, %c0_i32 : i32, i32
  }
}

</mosaic_0001>

<llo_original>
// kernel: tpu_custom_call.1
$region0: #{tpu_custom_call.1}
  #allocation0 [shape = 'u32[]', space=smem, size = 0x4, offset = 0x4, fixed_abs, tag = 'smem constant byte address 0x4 - core index']
  #allocation1 [shape = 'u32[144,128]{1,0:T(1,128)}', space=vmem, size = 0x12000, scoped, tag = 'internal scratch']
  #allocation2 [shape = 'bf16[8,128]{1,0:T(8,128)(2,1)}', space=vmem, size = 0x800, scoped, tag = 'scratch operand']
  #allocation3 [shape = 'bf16[16,128]{1,0:T(16,128)(2,1)}', space=vmem, size = 0x1000, scoped, tag = 'scratch operand']
  #allocation4 [shape = 'f32[1,128]{1,0:T(1,128)}', space=vmem, size = 0x200, scoped, tag = 'scratch operand']
  #allocation5 [shape = 'f32[1,128]{1,0:T(1,128)}', space=vmem, size = 0x200, scoped, tag = 'scratch operand']
  #allocation6 [shape = 's32[1]{0}', space=sflag, size = 0x4, scoped, tag = 'scoped memory for tpu_custom_call.1']
  #allocation7 [shape = 's32[1]{0:T(128)S(6)}', space=smem, size = 0x200, scoped, tag = 'prefetched SMEM operand 0']
  %s0 = inlined_call_operand.<no memory space> [shape: s32[1], index: 0, kind: input, shape index: {}]
  %s1 = inlined_call_operand.vmem [shape: bf16[16,8], index: 1, kind: input, shape index: {}]
  %s2 = inlined_call_operand.hbm [shape: bf16[16,16], index: 2, kind: input, shape index: {}]
  %s3 = inlined_call_operand.hbm [shape: f32[1,1024], index: 3, kind: input, shape index: {}]
  %s4 = inlined_call_operand.hbm [shape: f32[8,128], index: 4, kind: input, shape index: {}]
  %s5 = inlined_call_operand.vmem [shape: f32[16,128], index: 5, kind: input, shape index: {}]
  %s6 = inlined_call_operand.hbm [shape: f32[1,128], index: 6, kind: input, shape index: {}]
  %s7 = inlined_call_operand.vmem [shape: bf16[128,128], index: 7, kind: input, shape index: {}]
  %s8 = inlined_call_operand.hbm [shape: f32[1,128], index: 8, kind: input, shape index: {}]
  %s9 = inlined_call_operand.hbm [shape: f32[128,128], index: 9, kind: input, shape index: {}]
  %s10 = inlined_call_operand.vmem [shape: bf16[1024,128], index: 10, kind: input, shape index: {}]
  %s11 = inlined_call_operand.hbm [shape: f32[1,128], index: 11, kind: input, shape index: {}]
  %s12 = inlined_call_operand.hbm [shape: f32[128,128], index: 12, kind: input, shape index: {}]
  %s13 = inlined_call_operand.hbm [shape: f32[1,128], index: 13, kind: input, shape index: {}]
  %s14 = inlined_call_operand.vmem [shape: f32[128,8], index: 14, kind: input, shape index: {}]
  %s15 = inlined_call_operand.hbm [shape: f32[1,8], index: 15, kind: input, shape index: {}]
  %s16 = inlined_call_operand.vmem [shape: f32[128,8], index: 16, kind: input, shape index: {}]
  %s17 = inlined_call_operand.hbm [shape: f32[1,8], index: 17, kind: input, shape index: {}]
  %s18 = inlined_call_operand.vmem [shape: f32[128,16], index: 18, kind: input, shape index: {}]
  %s19 = inlined_call_operand.vmem [shape: f32[1,16], index: 19, kind: input, shape index: {}]
  %s20 = inlined_call_operand.vmem [shape: f32[128,16], index: 20, kind: input, shape index: {}]
  %s21 = inlined_call_operand.vmem [shape: f32[1,16], index: 21, kind: input, shape index: {}]
  %s22 = inlined_call_operand.hbm [shape: f32[1,128], index: 22, kind: output, shape index: {}]
  %s23 = sld [smem:[#allocation0]]
  $region154: #{tpu_custom_call.1} parent=0
    _
  %s25 = ssub.s32 1, %s23
  %s26 = scalar_select 0, %s25, %s23
  %27 = sst [smem:[#allocation7]] %s0
  $region1: #{tpu_custom_call.1} parent=0
    #allocation8 [shape = 'u8[4096]{0}', space=vmem, size = 0x1000, scoped, tag = 'input window, operand 2, single buffered']
    #allocation9 [shape = 's32[1]{0}', space=sflag, size = 0x4, scoped, tag = 'scoped memory for tpu_custom_call.1']
    #allocation10 [shape = 's32[1]{0}', space=sflag, size = 0x4, scoped, tag = 'scoped memory for tpu_custom_call.1']
    #allocation11 [shape = 'u8[4096]{0}', space=vmem, size = 0x1000, scoped, tag = 'input window, operand 3, single buffered']
    #allocation12 [shape = 's32[1]{0}', space=sflag, size = 0x4, scoped, tag = 'scoped memory for tpu_custom_call.1']
    #allocation13 [shape = 'u8[4096]{0}', space=vmem, size = 0x1000, scoped, tag = 'input window, operand 4, single buffered']
    #allocation14 [shape = 'u8[512]{0}', space=vmem, size = 0x400, scoped, tag = 'input window, operand 6, single buffered']
    #allocation15 [shape = 's32[1]{0}', space=sflag, size = 0x4, scoped, tag = 'scoped memory for tpu_custom_call.1']
    #allocation16 [shape = 'u8[512]{0}', space=vmem, size = 0x400, scoped, tag = 'input window, operand 8, single buffered']
    #allocation17 [shape = 'u8[65536]{0}', space=vmem, size = 0x10000, scoped, tag = 'input window, operand 9, single buffered']
    #allocation18 [shape = 's32[1]{0}', space=sflag, size = 0x4, scoped, tag = 'scoped memory for tpu_custom_call.1']
    #allocation19 [shape = 'u8[512]{0}', space=vmem, size = 0x400, scoped, tag = 'input window, operand 11, single buffered']
    #allocation20 [shape = 'u8[65536]{0}', space=vmem, size = 0x10000, scoped, tag = 'input window, operand 12, single buffered']
    #allocation21 [shape = 's32[1]{0}', space=sflag, size = 0x4, scoped, tag = 'scoped memory for tpu_custom_call.1']
    #allocation22 [shape = 'u8[512]{0}', space=vmem, size = 0x400, scoped, tag = 'input window, operand 13, single buffered']
    #allocation23 [shape = 'u8[512]{0}', space=vmem, size = 0x400, scoped, tag = 'input window, operand 15, single buffered']
    #allocation24 [shape = 's32[1]{0}', space=sflag, size = 0x4, scoped, tag = 'scoped memory for tpu_custom_call.1']
    #allocation25 [shape = 'u8[512]{0}', space=vmem, size = 0x400, scoped, tag = 'input window, operand 17, single buffered']
    #allocation26 [shape = 'u8[512]{0}', space=vmem, size = 0x400, scoped, tag = 'output window, operand 0, single buffered']
    %28 = vsyncpa [#allocation9], 0
    %29 = vsyncpa [#allocation12], 0
    %30 = vsyncpa [#allocation15], 0
    %31 = vsyncpa [#allocation18], 0
    %32 = vsyncpa [#allocation21], 0
    %33 = vsyncpa [#allocation24], 0
    %34 = vsyncpa [#allocation10], 0
    // Predicated region
    $region2: #{tpu_custom_call.1} parent=1 // pred_check
      _
    $region3: #{tpu_custom_call.1} parent=1 // pred_check_branch
      %36 = sbr.rel (0) target = $region5
    $region4: #{tpu_custom_call.1} parent=1 // pred_region
      %s37 = sadd.s32 0, 0
      %s38 = smul.u32 2, %s37
      %p39 = scmp.lt.s32.totalorder %s38, 1
      %s40 = scalar_select %p39, %s38, 1
      %s41 = smul.addr %s40, 4
      %s42 = scalar_lea.vmem %s1, %s41
      %s43 = sadd.s32 0, 0
      %s44 = smul.u32 2, %s43
    $region5: #{tpu_custom_call.1} parent=1 // pred_fallthru
      _
    // Predicated region
    $region6: #{tpu_custom_call.1} parent=1 // pred_check
      _
    $region7: #{tpu_custom_call.1} parent=1 // pred_check_branch
      %46 = sbr.rel (0) target = $region9
    $region8: #{tpu_custom_call.1} parent=1 // pred_region
      %s47 = sadd.s32 0, 0
      %s48 = smul.u32 2, %s47
      %s50 = ssub.s32 128, 128
      %51 = vsyncadd [#allocation9], %s50
      %s52 = smul.addr %s48, 64
      %s53 = scalar_lea.hbm %s2, %s52
      %s54 = sshll.u32 [#allocation8], 4
      %s55 = int_to_ptr.vmem [resolvable:$true] %s54
      %60 = dma.hbm_to_vmem [thread:$0]  %s53, 128, %s55, [#allocation9], 64, 64, 4
    $region9: #{tpu_custom_call.1} parent=1 // pred_fallthru
      _
    // Predicated region
    $region10: #{tpu_custom_call.1} parent=1 // pred_check
      _
    $region11: #{tpu_custom_call.1} parent=1 // pred_check_branch
      %62 = sbr.rel (0) target = $region13
    $region12: #{tpu_custom_call.1} parent=1 // pred_region
      %s64 = ssub.s32 128, 128
      %65 = vsyncadd [#allocation12], %s64
      %s67 = sshll.u32 [#allocation11], 4
      %s68 = int_to_ptr.vmem [resolvable:$true] %s67
      %70 = dma.hbm_to_vmem [thread:$0]  %s3, 128, %s68, [#allocation12]
    $region13: #{tpu_custom_call.1} parent=1 // pred_fallthru
      _
    // Predicated region
    $region14: #{tpu_custom_call.1} parent=1 // pred_check
      _
    $region15: #{tpu_custom_call.1} parent=1 // pred_check_branch
      %72 = sbr.rel (0) target = $region17
    $region16: #{tpu_custom_call.1} parent=1 // pred_region
      %s74 = ssub.s32 128, 128
      %75 = vsyncadd [#allocation12], %s74
      %s77 = sshll.u32 [#allocation13], 4
      %s78 = int_to_ptr.vmem [resolvable:$true] %s77
      %80 = dma.hbm_to_vmem [thread:$0]  %s4, 128, %s78, [#allocation12]
    $region17: #{tpu_custom_call.1} parent=1 // pred_fallthru
      _
    // Predicated region
    $region18: #{tpu_custom_call.1} parent=1 // pred_check
      _
    $region19: #{tpu_custom_call.1} parent=1 // pred_check_branch
      %82 = sbr.rel (0) target = $region21
    $region20: #{tpu_custom_call.1} parent=1 // pred_region
      _
    $region21: #{tpu_custom_call.1} parent=1 // pred_fallthru
      _
    // Predicated region
    $region22: #{tpu_custom_call.1} parent=1 // pred_check
      _
    $region23: #{tpu_custom_call.1} parent=1 // pred_check_branch
      %84 = sbr.rel (0) target = $region25
    $region24: #{tpu_custom_call.1} parent=1 // pred_region
      %s86 = ssub.s32 16, 16
      %87 = vsyncadd [#allocation15], %s86
      %s89 = sshll.u32 [#allocation14], 4
      %s90 = int_to_ptr.vmem [resolvable:$true] %s89
      %92 = dma.hbm_to_vmem [thread:$0]  %s6, 16, %s90, [#allocation15]
    $region25: #{tpu_custom_call.1} parent=1 // pred_fallthru
      _
    // Predicated region
    $region26: #{tpu_custom_call.1} parent=1 // pred_check
      _
    $region27: #{tpu_custom_call.1} parent=1 // pred_check_branch
      %94 = sbr.rel (0) target = $region29
    $region28: #{tpu_custom_call.1} parent=1 // pred_region
      _
    $region29: #{tpu_custom_call.1} parent=1 // pred_fallthru
      _
    // Predicated region
    $region30: #{tpu_custom_call.1} parent=1 // pred_check
      _
    $region31: #{tpu_custom_call.1} parent=1 // pred_check_branch
      %96 = sbr.rel (0) target = $region33
    $region32: #{tpu_custom_call.1} parent=1 // pred_region
      %s98 = ssub.s32 16, 16
      %99 = vsyncadd [#allocation15], %s98
      %s101 = sshll.u32 [#allocation16], 4
      %s102 = int_to_ptr.vmem [resolvable:$true] %s101
      %104 = dma.hbm_to_vmem [thread:$0]  %s8, 16, %s102, [#allocation15]
    $region33: #{tpu_custom_call.1} parent=1 // pred_fallthru
      _
    // Predicated region
    $region34: #{tpu_custom_call.1} parent=1 // pred_check
      _
    $region35: #{tpu_custom_call.1} parent=1 // pred_check_branch
      %106 = sbr.rel (0) target = $region37
    $region36: #{tpu_custom_call.1} parent=1 // pred_region
      %s108 = ssub.s32 2048, 2048
      %109 = vsyncadd [#allocation18], %s108
      %s110 = sshll.u32 [#allocation17], 4
      %s111 = int_to_ptr.vmem [resolvable:$true] %s110
      %116 = dma.hbm_to_vmem [thread:$0]  %s9, 2048, %s111, [#allocation18], 128, 128, 8
    $region37: #{tpu_custom_call.1} parent=1 // pred_fallthru
      _
    // Predicated region
    $region38: #{tpu_custom_call.1} parent=1 // pred_check
      _
    $region39: #{tpu_custom_call.1} parent=1 // pred_check_branch
      %118 = sbr.rel (0) target = $region41
    $region40: #{tpu_custom_call.1} parent=1 // pred_region
      _
    $region41: #{tpu_custom_call.1} parent=1 // pred_fallthru
      _
    // Predicated region
    $region42: #{tpu_custom_call.1} parent=1 // pred_check
      _
    $region43: #{tpu_custom_call.1} parent=1 // pred_check_branch
      %120 = sbr.rel (0) target = $region45
    $region44: #{tpu_custom_call.1} parent=1 // pred_region
      %s122 = ssub.s32 16, 16
      %123 = vsyncadd [#allocation18], %s122
      %s125 = sshll.u32 [#allocation19], 4
      %s126 = int_to_ptr.vmem [resolvable:$true] %s125
      %128 = dma.hbm_to_vmem [thread:$0]  %s11, 16, %s126, [#allocation18]
    $region45: #{tpu_custom_call.1} parent=1 // pred_fallthru
      _
    // Predicated region
    $region46: #{tpu_custom_call.1} parent=1 // pred_check
      _
    $region47: #{tpu_custom_call.1} parent=1 // pred_check_branch
      %130 = sbr.rel (0) target = $region49
    $region48: #{tpu_custom_call.1} parent=1 // pred_region
      %s132 = ssub.s32 2048, 2048
      %133 = vsyncadd [#allocation21], %s132
      %s134 = sshll.u32 [#allocation20], 4
      %s135 = int_to_ptr.vmem [resolvable:$true] %s134
      %140 = dma.hbm_to_vmem [thread:$0]  %s12, 2048, %s135, [#allocation21], 128, 128, 8
    $region49: #{tpu_custom_call.1} parent=1 // pred_fallthru
      _
    // Predicated region
    $region50: #{tpu_custom_call.1} parent=1 // pred_check
      _
    $region51: #{tpu_custom_call.1} parent=1 // pred_check_branch
      %142 = sbr.rel (0) target = $region53
    $region52: #{tpu_custom_call.1} parent=1 // pred_region
      %s144 = ssub.s32 16, 16
      %145 = vsyncadd [#allocation21], %s144
      %s147 = sshll.u32 [#allocation22], 4
      %s148 = int_to_ptr.vmem [resolvable:$true] %s147
      %150 = dma.hbm_to_vmem [thread:$0]  %s13, 16, %s148, [#allocation21]
    $region53: #{tpu_custom_call.1} parent=1 // pred_fallthru
      _
    // Predicated region
    $region54: #{tpu_custom_call.1} parent=1 // pred_check
      _
    $region55: #{tpu_custom_call.1} parent=1 // pred_check_branch
      %152 = sbr.rel (0) target = $region57
    $region56: #{tpu_custom_call.1} parent=1 // pred_region
      _
    $region57: #{tpu_custom_call.1} parent=1 // pred_fallthru
      _
    // Predicated region
    $region58: #{tpu_custom_call.1} parent=1 // pred_check
      _
    $region59: #{tpu_custom_call.1} parent=1 // pred_check_branch
      %154 = sbr.rel (0) target = $region61
    $region60: #{tpu_custom_call.1} parent=1 // pred_region
      %s156 = ssub.s32 16, 16
      %157 = vsyncadd [#allocation24], %s156
      %s159 = sshll.u32 [#allocation23], 4
      %s160 = int_to_ptr.vmem [resolvable:$true] %s159
      %162 = dma.hbm_to_vmem [thread:$0]  %s15, 16, %s160, [#allocation24]
    $region61: #{tpu_custom_call.1} parent=1 // pred_fallthru
      _
    // Predicated region
    $region62: #{tpu_custom_call.1} parent=1 // pred_check
      _
    $region63: #{tpu_custom_call.1} parent=1 // pred_check_branch
      %164 = sbr.rel (0) target = $region65
    $region64: #{tpu_custom_call.1} parent=1 // pred_region
      _
    $region65: #{tpu_custom_call.1} parent=1 // pred_fallthru
      _
    // Predicated region
    $region66: #{tpu_custom_call.1} parent=1 // pred_check
      _
    $region67: #{tpu_custom_call.1} parent=1 // pred_check_branch
      %166 = sbr.rel (0) target = $region69
    $region68: #{tpu_custom_call.1} parent=1 // pred_region
      %s168 = ssub.s32 16, 16
      %169 = vsyncadd [#allocation24], %s168
      %s171 = sshll.u32 [#allocation25], 4
      %s172 = int_to_ptr.vmem [resolvable:$true] %s171
      %174 = dma.hbm_to_vmem [thread:$0]  %s17, 16, %s172, [#allocation24]
    $region69: #{tpu_custom_call.1} parent=1 // pred_fallthru
      _
    // Predicated region
    $region70: #{tpu_custom_call.1} parent=1 // pred_check
      _
    $region71: #{tpu_custom_call.1} parent=1 // pred_check_branch
      %176 = sbr.rel (0) target = $region73
    $region72: #{tpu_custom_call.1} parent=1 // pred_region
      _
    $region73: #{tpu_custom_call.1} parent=1 // pred_fallthru
      _
    // Predicated region
    $region74: #{tpu_custom_call.1} parent=1 // pred_check
      _
    $region75: #{tpu_custom_call.1} parent=1 // pred_check_branch
      %178 = sbr.rel (0) target = $region77
    $region76: #{tpu_custom_call.1} parent=1 // pred_region
      _
    $region77: #{tpu_custom_call.1} parent=1 // pred_fallthru
      _
    // Predicated region
    $region78: #{tpu_custom_call.1} parent=1 // pred_check
      _
    $region79: #{tpu_custom_call.1} parent=1 // pred_check_branch
      %180 = sbr.rel (0) target = $region81
    $region80: #{tpu_custom_call.1} parent=1 // pred_region
      _
    $region81: #{tpu_custom_call.1} parent=1 // pred_fallthru
      _
    // Predicated region
    $region82: #{tpu_custom_call.1} parent=1 // pred_check
      _
    $region83: #{tpu_custom_call.1} parent=1 // pred_check_branch
      %182 = sbr.rel (0) target = $region85
    $region84: #{tpu_custom_call.1} parent=1 // pred_region
      _
    $region85: #{tpu_custom_call.1} parent=1 // pred_fallthru
      _
    // Predicated region
    $region86: #{tpu_custom_call.1} parent=1 // pred_check
      _
    $region87: #{tpu_custom_call.1} parent=1 // pred_check_branch
      %184 = sbr.rel (0) target = $region89
    $region88: #{tpu_custom_call.1} parent=1 // pred_region
      %185 = dma.done [#allocation9], 128
    $region89: #{tpu_custom_call.1} parent=1 // pred_fallthru
      _
    // Predicated region
    $region90: #{tpu_custom_call.1} parent=1 // pred_check
      _
    $region91: #{tpu_custom_call.1} parent=1 // pred_check_branch
      %187 = sbr.rel (0) target = $region93
    $region92: #{tpu_custom_call.1} parent=1 // pred_region
      %188 = dma.done [#allocation12], 128
    $region93: #{tpu_custom_call.1} parent=1 // pred_fallthru
      _
    // Predicated region
    $region94: #{tpu_custom_call.1} parent=1 // pred_check
      _
    $region95: #{tpu_custom_call.1} parent=1 // pred_check_branch
      %190 = sbr.rel (0) target = $region97
    $region96: #{tpu_custom_call.1} parent=1 // pred_region
      %191 = dma.done [#allocation12], 128
    $region97: #{tpu_custom_call.1} parent=1 // pred_fallthru
      _
    // Predicated region
    $region98: #{tpu_custom_call.1} parent=1 // pred_check
      _
    $region99: #{tpu_custom_call.1} parent=1 // pred_check_branch
      %193 = sbr.rel (0) target = $region101
    $region100: #{tpu_custom_call.1} parent=1 // pred_region
      %194 = dma.done [#allocation15], 16
    $region101: #{tpu_custom_call.1} parent=1 // pred_fallthru
      _
    // Predicated region
    $region102: #{tpu_custom_call.1} parent=1 // pred_check
      _
    $region103: #{tpu_custom_call.1} parent=1 // pred_check_branch
      %196 = sbr.rel (0) target = $region105
    $region104: #{tpu_custom_call.1} parent=1 // pred_region
      %197 = dma.done [#allocation15], 16
    $region105: #{tpu_custom_call.1} parent=1 // pred_fallthru
      _
    // Predicated region
    $region106: #{tpu_custom_call.1} parent=1 // pred_check
      _
    $region107: #{tpu_custom_call.1} parent=1 // pred_check_branch
      %199 = sbr.rel (0) target = $region109
    $region108: #{tpu_custom_call.1} parent=1 // pred_region
      %200 = dma.done [#allocation18], 2048
    $region109: #{tpu_custom_call.1} parent=1 // pred_fallthru
      _
    // Predicated region
    $region110: #{tpu_custom_call.1} parent=1 // pred_check
      _
    $region111: #{tpu_custom_call.1} parent=1 // pred_check_branch
      %202 = sbr.rel (0) target = $region113
    $region112: #{tpu_custom_call.1} parent=1 // pred_region
      %203 = dma.done [#allocation18], 16
    $region113: #{tpu_custom_call.1} parent=1 // pred_fallthru
      _
    // Predicated region
    $region114: #{tpu_custom_call.1} parent=1 // pred_check
      _
    $region115: #{tpu_custom_call.1} parent=1 // pred_check_branch
      %205 = sbr.rel (0) target = $region117
    $region116: #{tpu_custom_call.1} parent=1 // pred_region
      %206 = dma.done [#allocation21], 2048
    $region117: #{tpu_custom_call.1} parent=1 // pred_fallthru
      _
    // Predicated region
    $region118: #{tpu_custom_call.1} parent=1 // pred_check
      _
    $region119: #{tpu_custom_call.1} parent=1 // pred_check_branch
      %208 = sbr.rel (0) target = $region121
    $region120: #{tpu_custom_call.1} parent=1 // pred_region
      %209 = dma.done [#allocation21], 16
    $region121: #{tpu_custom_call.1} parent=1 // pred_fallthru
      _
    // Predicated region
    $region122: #{tpu_custom_call.1} parent=1 // pred_check
      _
    $region123: #{tpu_custom_call.1} parent=1 // pred_check_branch
      %211 = sbr.rel (0) target = $region125
    $region124: #{tpu_custom_call.1} parent=1 // pred_region
      %212 = dma.done [#allocation24], 16
    $region125: #{tpu_custom_call.1} parent=1 // pred_fallthru
      _
    // Predicated region
    $region126: #{tpu_custom_call.1} parent=1 // pred_check
      _
    $region127: #{tpu_custom_call.1} parent=1 // pred_check_branch
      %214 = sbr.rel (0) target = $region129
    $region128: #{tpu_custom_call.1} parent=1 // pred_region
      %215 = dma.done [#allocation24], 16
    $region129: #{tpu_custom_call.1} parent=1 // pred_fallthru
      _
    %s216 = sadd.s32 0, 0
    %s217 = smul.u32 2, %s216
    %p218 = scmp.lt.s32.totalorder %s217, 1
    %s219 = scalar_select %p218, %s217, 1
    %s220 = smul.addr %s219, 4
    %s221 = scalar_lea.vmem %s1, %s220
    %s222 = sadd.s32 0, 0
    %s223 = smul.u32 2, %s222
    %p224 = scmp.lt.s32.totalorder %s223, 1
    %s225 = scalar_select %p224, %s223, 1
    %s226 = smul.addr %s225, 4
    %s227 = scalar_lea.vmem %s1, %s226
    %s228 = sadd.s32 0, 0
    %s229 = smul.u32 2, %s228
    %s230 = sadd.s32 0, 0
    %s231 = smul.u32 2, %s230
    %p233 = scmp.eq.s32.totalorder 0, 0
    // Predicated region
    $region130: #{tpu_custom_call.1} parent=1 // pred_check
      %p234 = pneg %p233
    $region131: #{tpu_custom_call.1} parent=1 // pred_check_branch
      %236 = sbr.rel (%p234) target = $region133
    $region132: #{tpu_custom_call.1} parent=1 // pred_region
      %v237 = vld [vmem:[#allocation11] sm:$0xff]
      %v239 = vlaneseq
      %v240 = vshrl.u32 %v239, 7
      %v241 = vsub.s32 0, %v240
      %v242 = vrot.slane %v237, %v241
      %v243 = vlaneseq
      %v244 = vshrl.u32 %v243, 7
      %v245 = vsub.s32 1, %v244
      %v246 = vrot.slane %v237, %v245
      %v247 = vlaneseq
      %v248 = vshrl.u32 %v247, 7
      %v249 = vsub.s32 2, %v248
      %v250 = vrot.slane %v237, %v249
      %v251 = vlaneseq
      %v252 = vshrl.u32 %v251, 7
      %v253 = vsub.s32 3, %v252
      %v254 = vrot.slane %v237, %v253
      %v255 = vlaneseq
      %v256 = vshrl.u32 %v255, 7
      %v257 = vsub.s32 4, %v256
      %v258 = vrot.slane %v237, %v257
      %v259 = vlaneseq
      %v260 = vshrl.u32 %v259, 7
      %v261 = vsub.s32 5, %v260
      %v262 = vrot.slane %v237, %v261
      %v263 = vlaneseq
      %v264 = vshrl.u32 %v263, 7
      %v265 = vsub.s32 6, %v264
      %v266 = vrot.slane %v237, %v265
      %v267 = vlaneseq
      %v268 = vshrl.u32 %v267, 7
      %v269 = vsub.s32 7, %v268
      %v270 = vrot.slane %v237, %v269
      %v279 = vpack.c.bf16 %v242, %v242
      %v280 = vpack.c.bf16 %v246, %v246
      %v281 = vpack.c.bf16 %v250, %v250
      %v282 = vpack.c.bf16 %v254, %v254
      %v283 = vpack.c.bf16 %v258, %v258
      %v284 = vpack.c.bf16 %v262, %v262
      %v285 = vpack.c.bf16 %v266, %v266
      %v286 = vpack.c.bf16 %v270, %v270
      %v287 = vld [vmem:[%s10] sm:$0xf]
      %v288 = vld [vmem:[%s10 + $0x4] sm:$0xf]
      %v289 = vld [vmem:[%s10 + $0x8] sm:$0xf]
      %v290 = vld [vmem:[%s10 + $0xc] sm:$0xf]
      %v291 = vld [vmem:[%s10 + $0x10] sm:$0xf]
      %v292 = vld [vmem:[%s10 + $0x14] sm:$0xf]
      %v293 = vld [vmem:[%s10 + $0x18] sm:$0xf]
      %v294 = vld [vmem:[%s10 + $0x1c] sm:$0xf]
      %v295 = vld [vmem:[%s10 + $0x20] sm:$0xf]
      %v296 = vld [vmem:[%s10 + $0x24] sm:$0xf]
      %v297 = vld [vmem:[%s10 + $0x28] sm:$0xf]
      %v298 = vld [vmem:[%s10 + $0x2c] sm:$0xf]
      %v299 = vld [vmem:[%s10 + $0x30] sm:$0xf]
      %v300 = vld [vmem:[%s10 + $0x34] sm:$0xf]
      %v301 = vld [vmem:[%s10 + $0x38] sm:$0xf]
      %v302 = vld [vmem:[%s10 + $0x3c] sm:$0xf]
      %v303 = vld [vmem:[%s10 + $0x40] sm:$0xf]
      %v304 = vld [vmem:[%s10 + $0x44] sm:$0xf]
      %v305 = vld [vmem:[%s10 + $0x48] sm:$0xf]
      %v306 = vld [vmem:[%s10 + $0x4c] sm:$0xf]
      %v307 = vld [vmem:[%s10 + $0x50] sm:$0xf]
      %v308 = vld [vmem:[%s10 + $0x54] sm:$0xf]
      %v309 = vld [vmem:[%s10 + $0x58] sm:$0xf]
      %v310 = vld [vmem:[%s10 + $0x5c] sm:$0xf]
      %v311 = vld [vmem:[%s10 + $0x60] sm:$0xf]
      %v312 = vld [vmem:[%s10 + $0x64] sm:$0xf]
      %v313 = vld [vmem:[%s10 + $0x68] sm:$0xf]
      %v314 = vld [vmem:[%s10 + $0x6c] sm:$0xf]
      %v315 = vld [vmem:[%s10 + $0x70] sm:$0xf]
      %v316 = vld [vmem:[%s10 + $0x74] sm:$0xf]
      %v317 = vld [vmem:[%s10 + $0x78] sm:$0xf]
      %v318 = vld [vmem:[%s10 + $0x7c] sm:$0xf]
      %v319 = vld [vmem:[%s10 + $0x80] sm:$0xf]
      %v320 = vld [vmem:[%s10 + $0x84] sm:$0xf]
      %v321 = vld [vmem:[%s10 + $0x88] sm:$0xf]
      %v322 = vld [vmem:[%s10 + $0x8c] sm:$0xf]
      %v323 = vld [vmem:[%s10 + $0x90] sm:$0xf]
      %v324 = vld [vmem:[%s10 + $0x94] sm:$0xf]
      %v325 = vld [vmem:[%s10 + $0x98] sm:$0xf]
      %v326 = vld [vmem:[%s10 + $0x9c] sm:$0xf]
      %v327 = vld [vmem:[%s10 + $0xa0] sm:$0xf]
      %v328 = vld [vmem:[%s10 + $0xa4] sm:$0xf]
      %v329 = vld [vmem:[%s10 + $0xa8] sm:$0xf]
      %v330 = vld [vmem:[%s10 + $0xac] sm:$0xf]
      %v331 = vld [vmem:[%s10 + $0xb0] sm:$0xf]
      %v332 = vld [vmem:[%s10 + $0xb4] sm:$0xf]
      %v333 = vld [vmem:[%s10 + $0xb8] sm:$0xf]
      %v334 = vld [vmem:[%s10 + $0xbc] sm:$0xf]
      %v335 = vld [vmem:[%s10 + $0xc0] sm:$0xf]
      %v336 = vld [vmem:[%s10 + $0xc4] sm:$0xf]
      %v337 = vld [vmem:[%s10 + $0xc8] sm:$0xf]
      %v338 = vld [vmem:[%s10 + $0xcc] sm:$0xf]
      %v339 = vld [vmem:[%s10 + $0xd0] sm:$0xf]
      %v340 = vld [vmem:[%s10 + $0xd4] sm:$0xf]
      %v341 = vld [vmem:[%s10 + $0xd8] sm:$0xf]
      %v342 = vld [vmem:[%s10 + $0xdc] sm:$0xf]
      %v343 = vld [vmem:[%s10 + $0xe0] sm:$0xf]
      %v344 = vld [vmem:[%s10 + $0xe4] sm:$0xf]
      %v345 = vld [vmem:[%s10 + $0xe8] sm:$0xf]
      %v346 = vld [vmem:[%s10 + $0xec] sm:$0xf]
      %v347 = vld [vmem:[%s10 + $0xf0] sm:$0xf]
      %v348 = vld [vmem:[%s10 + $0xf4] sm:$0xf]
      %v349 = vld [vmem:[%s10 + $0xf8] sm:$0xf]
      %v350 = vld [vmem:[%s10 + $0xfc] sm:$0xf]
      %v351 = vld [vmem:[%s10 + $0x100] sm:$0xf]
      %v352 = vld [vmem:[%s10 + $0x104] sm:$0xf]
      %v353 = vld [vmem:[%s10 + $0x108] sm:$0xf]
      %v354 = vld [vmem:[%s10 + $0x10c] sm:$0xf]
      %v355 = vld [vmem:[%s10 + $0x110] sm:$0xf]
      %v356 = vld [vmem:[%s10 + $0x114] sm:$0xf]
      %v357 = vld [vmem:[%s10 + $0x118] sm:$0xf]
      %v358 = vld [vmem:[%s10 + $0x11c] sm:$0xf]
      %v359 = vld [vmem:[%s10 + $0x120] sm:$0xf]
      %v360 = vld [vmem:[%s10 + $0x124] sm:$0xf]
      %v361 = vld [vmem:[%s10 + $0x128] sm:$0xf]
      %v362 = vld [vmem:[%s10 + $0x12c] sm:$0xf]
      %v363 = vld [vmem:[%s10 + $0x130] sm:$0xf]
      %v364 = vld [vmem:[%s10 + $0x134] sm:$0xf]
      %v365 = vld [vmem:[%s10 + $0x138] sm:$0xf]
      %v366 = vld [vmem:[%s10 + $0x13c] sm:$0xf]
      %v367 = vld [vmem:[%s10 + $0x140] sm:$0xf]
      %v368 = vld [vmem:[%s10 + $0x144] sm:$0xf]
      %v369 = vld [vmem:[%s10 + $0x148] sm:$0xf]
      %v370 = vld [vmem:[%s10 + $0x14c] sm:$0xf]
      %v371 = vld [vmem:[%s10 + $0x150] sm:$0xf]
      %v372 = vld [vmem:[%s10 + $0x154] sm:$0xf]
      %v373 = vld [vmem:[%s10 + $0x158] sm:$0xf]
      %v374 = vld [vmem:[%s10 + $0x15c] sm:$0xf]
      %v375 = vld [vmem:[%s10 + $0x160] sm:$0xf]
      %v376 = vld [vmem:[%s10 + $0x164] sm:$0xf]
      %v377 = vld [vmem:[%s10 + $0x168] sm:$0xf]
      %v378 = vld [vmem:[%s10 + $0x16c] sm:$0xf]
      %v379 = vld [vmem:[%s10 + $0x170] sm:$0xf]
      %v380 = vld [vmem:[%s10 + $0x174] sm:$0xf]
      %v381 = vld [vmem:[%s10 + $0x178] sm:$0xf]
      %v382 = vld [vmem:[%s10 + $0x17c] sm:$0xf]
      %v383 = vld [vmem:[%s10 + $0x180] sm:$0xf]
      %v384 = vld [vmem:[%s10 + $0x184] sm:$0xf]
      %v385 = vld [vmem:[%s10 + $0x188] sm:$0xf]
      %v386 = vld [vmem:[%s10 + $0x18c] sm:$0xf]
      %v387 = vld [vmem:[%s10 + $0x190] sm:$0xf]
      %v388 = vld [vmem:[%s10 + $0x194] sm:$0xf]
      %v389 = vld [vmem:[%s10 + $0x198] sm:$0xf]
      %v390 = vld [vmem:[%s10 + $0x19c] sm:$0xf]
      %v391 = vld [vmem:[%s10 + $0x1a0] sm:$0xf]
      %v392 = vld [vmem:[%s10 + $0x1a4] sm:$0xf]
      %v393 = vld [vmem:[%s10 + $0x1a8] sm:$0xf]
      %v394 = vld [vmem:[%s10 + $0x1ac] sm:$0xf]
      %v395 = vld [vmem:[%s10 + $0x1b0] sm:$0xf]
      %v396 = vld [vmem:[%s10 + $0x1b4] sm:$0xf]
      %v397 = vld [vmem:[%s10 + $0x1b8] sm:$0xf]
      %v398 = vld [vmem:[%s10 + $0x1bc] sm:$0xf]
      %v399 = vld [vmem:[%s10 + $0x1c0] sm:$0xf]
      %v400 = vld [vmem:[%s10 + $0x1c4] sm:$0xf]
      %v401 = vld [vmem:[%s10 + $0x1c8] sm:$0xf]
      %v402 = vld [vmem:[%s10 + $0x1cc] sm:$0xf]
      %v403 = vld [vmem:[%s10 + $0x1d0] sm:$0xf]
      %v404 = vld [vmem:[%s10 + $0x1d4] sm:$0xf]
      %v405 = vld [vmem:[%s10 + $0x1d8] sm:$0xf]
      %v406 = vld [vmem:[%s10 + $0x1dc] sm:$0xf]
      %v407 = vld [vmem:[%s10 + $0x1e0] sm:$0xf]
      %v408 = vld [vmem:[%s10 + $0x1e4] sm:$0xf]
      %v409 = vld [vmem:[%s10 + $0x1e8] sm:$0xf]
      %v410 = vld [vmem:[%s10 + $0x1ec] sm:$0xf]
      %v411 = vld [vmem:[%s10 + $0x1f0] sm:$0xf]
      %v412 = vld [vmem:[%s10 + $0x1f4] sm:$0xf]
      %v413 = vld [vmem:[%s10 + $0x1f8] sm:$0xf]
      %v414 = vld [vmem:[%s10 + $0x1fc] sm:$0xf]
      %v415 = vld [vmem:[#allocation19] sm:$0x1]
      %v544 = vunpack.c.l.b16 %v287
      %v545 = vunpack.c.l.b16 %v288
      %v546 = vunpack.c.l.b16 %v289
      %v547 = vunpack.c.l.b16 %v290
      %v548 = vunpack.c.l.b16 %v291
      %v549 = vunpack.c.l.b16 %v292
      %v550 = vunpack.c.l.b16 %v293
      %v551 = vunpack.c.l.b16 %v294
      %v552 = vunpack.c.l.b16 %v295
      %v553 = vunpack.c.l.b16 %v296
      %v554 = vunpack.c.l.b16 %v297
      %v555 = vunpack.c.l.b16 %v298
      %v556 = vunpack.c.l.b16 %v299
      %v557 = vunpack.c.l.b16 %v300
      %v558 = vunpack.c.l.b16 %v301
      %v559 = vunpack.c.l.b16 %v302
      %v560 = vunpack.c.l.b16 %v303
      %v561 = vunpack.c.l.b16 %v304
      %v562 = vunpack.c.l.b16 %v305
      %v563 = vunpack.c.l.b16 %v306
      %v564 = vunpack.c.l.b16 %v307
      %v565 = vunpack.c.l.b16 %v308
      %v566 = vunpack.c.l.b16 %v309
      %v567 = vunpack.c.l.b16 %v310
      %v568 = vunpack.c.l.b16 %v311
      %v569 = vunpack.c.l.b16 %v312
      %v570 = vunpack.c.l.b16 %v313
      %v571 = vunpack.c.l.b16 %v314
      %v572 = vunpack.c.l.b16 %v315
      %v573 = vunpack.c.l.b16 %v316
      %v574 = vunpack.c.l.b16 %v317
      %v575 = vunpack.c.l.b16 %v318
      %v576 = vunpack.c.l.b16 %v319
      %v577 = vunpack.c.l.b16 %v320
      %v578 = vunpack.c.l.b16 %v321
      %v579 = vunpack.c.l.b16 %v322
      %v580 = vunpack.c.l.b16 %v323
      %v581 = vunpack.c.l.b16 %v324
      %v582 = vunpack.c.l.b16 %v325
      %v583 = vunpack.c.l.b16 %v326
      %v584 = vunpack.c.l.b16 %v327
      %v585 = vunpack.c.l.b16 %v328
      %v586 = vunpack.c.l.b16 %v329
      %v587 = vunpack.c.l.b16 %v330
      %v588 = vunpack.c.l.b16 %v331
      %v589 = vunpack.c.l.b16 %v332
      %v590 = vunpack.c.l.b16 %v333
      %v591 = vunpack.c.l.b16 %v334
      %v592 = vunpack.c.l.b16 %v335
      %v593 = vunpack.c.l.b16 %v336
      %v594 = vunpack.c.l.b16 %v337
      %v595 = vunpack.c.l.b16 %v338
      %v596 = vunpack.c.l.b16 %v339
      %v597 = vunpack.c.l.b16 %v340
      %v598 = vunpack.c.l.b16 %v341
      %v599 = vunpack.c.l.b16 %v342
      %v600 = vunpack.c.l.b16 %v343
      %v601 = vunpack.c.l.b16 %v344
      %v602 = vunpack.c.l.b16 %v345
      %v603 = vunpack.c.l.b16 %v346
      %v604 = vunpack.c.l.b16 %v347
      %v605 = vunpack.c.l.b16 %v348
      %v606 = vunpack.c.l.b16 %v349
      %v607 = vunpack.c.l.b16 %v350
      %v608 = vunpack.c.l.b16 %v351
      %v609 = vunpack.c.l.b16 %v352
      %v610 = vunpack.c.l.b16 %v353
      %v611 = vunpack.c.l.b16 %v354
      %v612 = vunpack.c.l.b16 %v355
      %v613 = vunpack.c.l.b16 %v356
      %v614 = vunpack.c.l.b16 %v357
      %v615 = vunpack.c.l.b16 %v358
      %v616 = vunpack.c.l.b16 %v359
      %v617 = vunpack.c.l.b16 %v360
      %v618 = vunpack.c.l.b16 %v361
      %v619 = vunpack.c.l.b16 %v362
      %v620 = vunpack.c.l.b16 %v363
      %v621 = vunpack.c.l.b16 %v364
      %v622 = vunpack.c.l.b16 %v365
      %v623 = vunpack.c.l.b16 %v366
      %v624 = vunpack.c.l.b16 %v367
      %v625 = vunpack.c.l.b16 %v368
      %v626 = vunpack.c.l.b16 %v369
      %v627 = vunpack.c.l.b16 %v370
      %v628 = vunpack.c.l.b16 %v371
      %v629 = vunpack.c.l.b16 %v372
      %v630 = vunpack.c.l.b16 %v373
      %v631 = vunpack.c.l.b16 %v374
      %v632 = vunpack.c.l.b16 %v375
      %v633 = vunpack.c.l.b16 %v376
      %v634 = vunpack.c.l.b16 %v377
      %v635 = vunpack.c.l.b16 %v378
      %v636 = vunpack.c.l.b16 %v379
      %v637 = vunpack.c.l.b16 %v380
      %v638 = vunpack.c.l.b16 %v381
      %v639 = vunpack.c.l.b16 %v382
      %v640 = vunpack.c.l.b16 %v383
      %v641 = vunpack.c.l.b16 %v384
      %v642 = vunpack.c.l.b16 %v385
      %v643 = vunpack.c.l.b16 %v386
      %v644 = vunpack.c.l.b16 %v387
      %v645 = vunpack.c.l.b16 %v388
      %v646 = vunpack.c.l.b16 %v389
      %v647 = vunpack.c.l.b16 %v390
      %v648 = vunpack.c.l.b16 %v391
      %v649 = vunpack.c.l.b16 %v392
      %v650 = vunpack.c.l.b16 %v393
      %v651 = vunpack.c.l.b16 %v394
      %v652 = vunpack.c.l.b16 %v395
      %v653 = vunpack.c.l.b16 %v396
      %v654 = vunpack.c.l.b16 %v397
      %v655 = vunpack.c.l.b16 %v398
      %v656 = vunpack.c.l.b16 %v399
      %v657 = vunpack.c.l.b16 %v400
      %v658 = vunpack.c.l.b16 %v401
      %v659 = vunpack.c.l.b16 %v402
      %v660 = vunpack.c.l.b16 %v403
      %v661 = vunpack.c.l.b16 %v404
      %v662 = vunpack.c.l.b16 %v405
      %v663 = vunpack.c.l.b16 %v406
      %v664 = vunpack.c.l.b16 %v407
      %v665 = vunpack.c.l.b16 %v408
      %v666 = vunpack.c.l.b16 %v409
      %v667 = vunpack.c.l.b16 %v410
      %v668 = vunpack.c.l.b16 %v411
      %v669 = vunpack.c.l.b16 %v412
      %v670 = vunpack.c.l.b16 %v413
      %v671 = vunpack.c.l.b16 %v414
      %v672 = vpack.c.b16 %v545, %v544
      %v673 = vpack.c.b16 %v547, %v546
      %v674 = vpack.c.b16 %v549, %v548
      %v675 = vpack.c.b16 %v551, %v550
      %v676 = vpack.c.b16 %v553, %v552
      %v677 = vpack.c.b16 %v555, %v554
      %v678 = vpack.c.b16 %v557, %v556
      %v679 = vpack.c.b16 %v559, %v558
      %v680 = vpack.c.b16 %v561, %v560
      %v681 = vpack.c.b16 %v563, %v562
      %v682 = vpack.c.b16 %v565, %v564
      %v683 = vpack.c.b16 %v567, %v566
      %v684 = vpack.c.b16 %v569, %v568
      %v685 = vpack.c.b16 %v571, %v570
      %v686 = vpack.c.b16 %v573, %v572
      %v687 = vpack.c.b16 %v575, %v574
      %v688 = vpack.c.b16 %v577, %v576
      %v689 = vpack.c.b16 %v579, %v578
      %v690 = vpack.c.b16 %v581, %v580
      %v691 = vpack.c.b16 %v583, %v582
      %v692 = vpack.c.b16 %v585, %v584
      %v693 = vpack.c.b16 %v587, %v586
      %v694 = vpack.c.b16 %v589, %v588
      %v695 = vpack.c.b16 %v591, %v590
      %v696 = vpack.c.b16 %v593, %v592
      %v697 = vpack.c.b16 %v595, %v594
      %v698 = vpack.c.b16 %v597, %v596
      %v699 = vpack.c.b16 %v599, %v598
      %v700 = vpack.c.b16 %v601, %v600
      %v701 = vpack.c.b16 %v603, %v602
      %v702 = vpack.c.b16 %v605, %v604
      %v703 = vpack.c.b16 %v607, %v606
      %v704 = vpack.c.b16 %v609, %v608
      %v705 = vpack.c.b16 %v611, %v610
      %v706 = vpack.c.b16 %v613, %v612
      %v707 = vpack.c.b16 %v615, %v614
      %v708 = vpack.c.b16 %v617, %v616
      %v709 = vpack.c.b16 %v619, %v618
      %v710 = vpack.c.b16 %v621, %v620
      %v711 = vpack.c.b16 %v623, %v622
      %v712 = vpack.c.b16 %v625, %v624
      %v713 = vpack.c.b16 %v627, %v626
      %v714 = vpack.c.b16 %v629, %v628
      %v715 = vpack.c.b16 %v631, %v630
      %v716 = vpack.c.b16 %v633, %v632
      %v717 = vpack.c.b16 %v635, %v634
      %v718 = vpack.c.b16 %v637, %v636
      %v719 = vpack.c.b16 %v639, %v638
      %v720 = vpack.c.b16 %v641, %v640
      %v721 = vpack.c.b16 %v643, %v642
      %v722 = vpack.c.b16 %v645, %v644
      %v723 = vpack.c.b16 %v647, %v646
      %v724 = vpack.c.b16 %v649, %v648
      %v725 = vpack.c.b16 %v651, %v650
      %v726 = vpack.c.b16 %v653, %v652
      %v727 = vpack.c.b16 %v655, %v654
      %v728 = vpack.c.b16 %v657, %v656
      %v729 = vpack.c.b16 %v659, %v658
      %v730 = vpack.c.b16 %v661, %v660
      %v731 = vpack.c.b16 %v663, %v662
      %v732 = vpack.c.b16 %v665, %v664
      %v733 = vpack.c.b16 %v667, %v666
      %v734 = vpack.c.b16 %v669, %v668
      %v735 = vpack.c.b16 %v671, %v670
      %800 = vmatprep.subr.bf16.mxu0 0
      %801 = vmatpush1.bf16.msra.mxu0 %v672
      %802 = vmatprep.subr.bf16.mxu0 0
      %803 = vmatpush1.bf16.msra.mxu0 %v673
      %804 = vmatprep.subr.bf16.mxu0 0
      %805 = vmatpush1.bf16.msra.mxu0 %v674
      %806 = vmatprep.subr.bf16.mxu0 0
      %807 = vmatpush1.bf16.msra.mxu0 %v675
      %808 = vmatprep.subr.bf16.mxu0 0
      %809 = vmatpush1.bf16.msra.mxu0 %v676
      %810 = vmatprep.subr.bf16.mxu0 0
      %811 = vmatpush1.bf16.msra.mxu0 %v677
      %812 = vmatprep.subr.bf16.mxu0 0
      %813 = vmatpush1.bf16.msra.mxu0 %v678
      %814 = vmatprep.subr.bf16.mxu0 0
      %815 = vmatpush1.bf16.msra.mxu0 %v679
      %816 = vmatprep.subr.bf16.mxu0 0
      %817 = vmatpush1.bf16.msra.mxu0 %v680
      %818 = vmatprep.subr.bf16.mxu0 0
      %819 = vmatpush1.bf16.msra.mxu0 %v681
      %820 = vmatprep.subr.bf16.mxu0 0
      %821 = vmatpush1.bf16.msra.mxu0 %v682
      %822 = vmatprep.subr.bf16.mxu0 0
      %823 = vmatpush1.bf16.msra.mxu0 %v683
      %824 = vmatprep.subr.bf16.mxu0 0
      %825 = vmatpush1.bf16.msra.mxu0 %v684
      %826 = vmatprep.subr.bf16.mxu0 0
      %827 = vmatpush1.bf16.msra.mxu0 %v685
      %828 = vmatprep.subr.bf16.mxu0 0
      %829 = vmatpush1.bf16.msra.mxu0 %v686
      %830 = vmatprep.subr.bf16.mxu0 0
      %831 = vmatpush1.bf16.msra.mxu0 %v687
      %832 = vmatprep.mubr.bf16.mxu0 %v280
      %833 = vmatmul.mubr.bf16.gmra.mrb[0].mxu0 %v279
      %v834 = vpop.f32.mrb[0].mxu0
      %v835 = vadd.f32 %v415, %v834
      %v836 = vpop.f32.mrb[0].mxu0
      %v837 = vpop.f32.mrb[0].mxu0
      %v838 = vpop.f32.mrb[0].mxu0
      %839 = vdwg.mxu0
      %840 = vmatprep.subr.bf16.mxu0 0
      %841 = vmatpush1.bf16.msra.mxu0 %v688
      %842 = vmatprep.subr.bf16.mxu0 0
      %843 = vmatpush1.bf16.msra.mxu0 %v689
      %844 = vmatprep.subr.bf16.mxu0 0
      %845 = vmatpush1.bf16.msra.mxu0 %v690
      %846 = vmatprep.subr.bf16.mxu0 0
      %847 = vmatpush1.bf16.msra.mxu0 %v691
      %848 = vmatprep.subr.bf16.mxu0 0
      %849 = vmatpush1.bf16.msra.mxu0 %v692
      %850 = vmatprep.subr.bf16.mxu0 0
      %851 = vmatpush1.bf16.msra.mxu0 %v693
      %852 = vmatprep.subr.bf16.mxu0 0
      %853 = vmatpush1.bf16.msra.mxu0 %v694
      %854 = vmatprep.subr.bf16.mxu0 0
      %855 = vmatpush1.bf16.msra.mxu0 %v695
      %856 = vmatprep.subr.bf16.mxu0 0
      %857 = vmatpush1.bf16.msra.mxu0 %v696
      %858 = vmatprep.subr.bf16.mxu0 0
      %859 = vmatpush1.bf16.msra.mxu0 %v697
      %860 = vmatprep.subr.bf16.mxu0 0
      %861 = vmatpush1.bf16.msra.mxu0 %v698
      %862 = vmatprep.subr.bf16.mxu0 0
      %863 = vmatpush1.bf16.msra.mxu0 %v699
      %864 = vmatprep.subr.bf16.mxu0 0
      %865 = vmatpush1.bf16.msra.mxu0 %v700
      %866 = vmatprep.subr.bf16.mxu0 0
      %867 = vmatpush1.bf16.msra.mxu0 %v701
      %868 = vmatprep.subr.bf16.mxu0 0
      %869 = vmatpush1.bf16.msra.mxu0 %v702
      %870 = vmatprep.subr.bf16.mxu0 0
      %871 = vmatpush1.bf16.msra.mxu0 %v703
      %872 = vmatprep.mubr.bf16.mxu0 %v282
      %873 = vmatmul.mubr.bf16.gmra.mrb[0].mxu0 %v281
      %v874 = vpop.f32.mrb[0].mxu0
      %v875 = vadd.f32 %v835, %v874
      %v876 = vpop.f32.mrb[0].mxu0
      %v877 = vpop.f32.mrb[0].mxu0
      %v878 = vpop.f32.mrb[0].mxu0
      %879 = vdwg.mxu0
      %880 = vmatprep.subr.bf16.mxu0 0
      %881 = vmatpush1.bf16.msra.mxu0 %v704
      %882 = vmatprep.subr.bf16.mxu0 0
      %883 = vmatpush1.bf16.msra.mxu0 %v705
      %884 = vmatprep.subr.bf16.mxu0 0
      %885 = vmatpush1.bf16.msra.mxu0 %v706
      %886 = vmatprep.subr.bf16.mxu0 0
      %887 = vmatpush1.bf16.msra.mxu0 %v707
      %888 = vmatprep.subr.bf16.mxu0 0
      %889 = vmatpush1.bf16.msra.mxu0 %v708
      %890 = vmatprep.subr.bf16.mxu0 0
      %891 = vmatpush1.bf16.msra.mxu0 %v709
      %892 = vmatprep.subr.bf16.mxu0 0
      %893 = vmatpush1.bf16.msra.mxu0 %v710
      %894 = vmatprep.subr.bf16.mxu0 0
      %895 = vmatpush1.bf16.msra.mxu0 %v711
      %896 = vmatprep.subr.bf16.mxu0 0
      %897 = vmatpush1.bf16.msra.mxu0 %v712
      %898 = vmatprep.subr.bf16.mxu0 0
      %899 = vmatpush1.bf16.msra.mxu0 %v713
      %900 = vmatprep.subr.bf16.mxu0 0
      %901 = vmatpush1.bf16.msra.mxu0 %v714
      %902 = vmatprep.subr.bf16.mxu0 0
      %903 = vmatpush1.bf16.msra.mxu0 %v715
      %904 = vmatprep.subr.bf16.mxu0 0
      %905 = vmatpush1.bf16.msra.mxu0 %v716
      %906 = vmatprep.subr.bf16.mxu0 0
      %907 = vmatpush1.bf16.msra.mxu0 %v717
      %908 = vmatprep.subr.bf16.mxu0 0
      %909 = vmatpush1.bf16.msra.mxu0 %v718
      %910 = vmatprep.subr.bf16.mxu0 0
      %911 = vmatpush1.bf16.msra.mxu0 %v719
      %912 = vmatprep.mubr.bf16.mxu0 %v284
      %913 = vmatmul.mubr.bf16.gmra.mrb[0].mxu0 %v283
      %v914 = vpop.f32.mrb[0].mxu0
      %v915 = vadd.f32 %v875, %v914
      %v916 = vpop.f32.mrb[0].mxu0
      %v917 = vpop.f32.mrb[0].mxu0
      %v918 = vpop.f32.mrb[0].mxu0
      %919 = vdwg.mxu0
      %920 = vmatprep.subr.bf16.mxu0 0
      %921 = vmatpush1.bf16.msra.mxu0 %v720
      %922 = vmatprep.subr.bf16.mxu0 0
      %923 = vmatpush1.bf16.msra.mxu0 %v721
      %924 = vmatprep.subr.bf16.mxu0 0
      %925 = vmatpush1.bf16.msra.mxu0 %v722
      %926 = vmatprep.subr.bf16.mxu0 0
      %927 = vmatpush1.bf16.msra.mxu0 %v723
      %928 = vmatprep.subr.bf16.mxu0 0
      %929 = vmatpush1.bf16.msra.mxu0 %v724
      %930 = vmatprep.subr.bf16.mxu0 0
      %931 = vmatpush1.bf16.msra.mxu0 %v725
      %932 = vmatprep.subr.bf16.mxu0 0
      %933 = vmatpush1.bf16.msra.mxu0 %v726
      %934 = vmatprep.subr.bf16.mxu0 0
      %935 = vmatpush1.bf16.msra.mxu0 %v727
      %936 = vmatprep.subr.bf16.mxu0 0
      %937 = vmatpush1.bf16.msra.mxu0 %v728
      %938 = vmatprep.subr.bf16.mxu0 0
      %939 = vmatpush1.bf16.msra.mxu0 %v729
      %940 = vmatprep.subr.bf16.mxu0 0
      %941 = vmatpush1.bf16.msra.mxu0 %v730
      %942 = vmatprep.subr.bf16.mxu0 0
      %943 = vmatpush1.bf16.msra.mxu0 %v731
      %944 = vmatprep.subr.bf16.mxu0 0
      %945 = vmatpush1.bf16.msra.mxu0 %v732
      %946 = vmatprep.subr.bf16.mxu0 0
      %947 = vmatpush1.bf16.msra.mxu0 %v733
      %948 = vmatprep.subr.bf16.mxu0 0
      %949 = vmatpush1.bf16.msra.mxu0 %v734
      %950 = vmatprep.subr.bf16.mxu0 0
      %951 = vmatpush1.bf16.msra.mxu0 %v735
      %952 = vmatprep.mubr.bf16.mxu0 %v286
      %953 = vmatmul.mubr.bf16.gmra.mrb[0].mxu0 %v285
      %v954 = vpop.f32.mrb[0].mxu0
      %v955 = vadd.f32 %v915, %v954
      %v956 = vpop.f32.mrb[0].mxu0
      %v957 = vpop.f32.mrb[0].mxu0
      %v958 = vpop.f32.mrb[0].mxu0
      %959 = vdwg.mxu0
      %v960 = vmax.f32 %v955, 0.0
      %v961 = vld [vmem:[#allocation20] sm:$0xff]
      %v962 = vld [vmem:[#allocation20 + $0x8] sm:$0xff]
      %v963 = vld [vmem:[#allocation20 + $0x10] sm:$0xff]
      %v964 = vld [vmem:[#allocation20 + $0x18] sm:$0xff]
      %v965 = vld [vmem:[#allocation20 + $0x20] sm:$0xff]
      %v966 = vld [vmem:[#allocation20 + $0x28] sm:$0xff]
      %v967 = vld [vmem:[#allocation20 + $0x30] sm:$0xff]
      %v968 = vld [vmem:[#allocation20 + $0x38] sm:$0xff]
      %v969 = vld [vmem:[#allocation20 + $0x40] sm:$0xff]
      %v970 = vld [vmem:[#allocation20 + $0x48] sm:$0xff]
      %v971 = vld [vmem:[#allocation20 + $0x50] sm:$0xff]
      %v972 = vld [vmem:[#allocation20 + $0x58] sm:$0xff]
      %v973 = vld [vmem:[#allocation20 + $0x60] sm:$0xff]
      %v974 = vld [vmem:[#allocation20 + $0x68] sm:$0xff]
      %v975 = vld [vmem:[#allocation20 + $0x70] sm:$0xff]
      %v976 = vld [vmem:[#allocation20 + $0x78] sm:$0xff]
      %v977 = vld [vmem:[#allocation22] sm:$0x1]
      %978 = vmatprep.subr.mxu0 0.0
      %979 = vmatpush1.msra.mxu0 %v961
      %980 = vmatprep.subr.mxu0 0.0
      %981 = vmatpush1.msra.mxu0 %v962
      %982 = vmatprep.subr.mxu0 0.0
      %983 = vmatpush1.msra.mxu0 %v963
      %984 = vmatprep.subr.mxu0 0.0
      %985 = vmatpush1.msra.mxu0 %v964
      %986 = vmatprep.subr.mxu0 0.0
      %987 = vmatpush1.msra.mxu0 %v965
      %988 = vmatprep.subr.mxu0 0.0
      %989 = vmatpush1.msra.mxu0 %v966
      %990 = vmatprep.subr.mxu0 0.0
      %991 = vmatpush1.msra.mxu0 %v967
      %992 = vmatprep.subr.mxu0 0.0
      %993 = vmatpush1.msra.mxu0 %v968
      %994 = vmatprep.subr.mxu0 0.0
      %995 = vmatpush1.msra.mxu0 %v969
      %996 = vmatprep.subr.mxu0 0.0
      %997 = vmatpush1.msra.mxu0 %v970
      %998 = vmatprep.subr.mxu0 0.0
      %999 = vmatpush1.msra.mxu0 %v971
      %1000 = vmatprep.subr.mxu0 0.0
      %1001 = vmatpush1.msra.mxu0 %v972
      %1002 = vmatprep.subr.mxu0 0.0
      %1003 = vmatpush1.msra.mxu0 %v973
      %1004 = vmatprep.subr.mxu0 0.0
      %1005 = vmatpush1.msra.mxu0 %v974
      %1006 = vmatprep.subr.mxu0 0.0
      %1007 = vmatpush1.msra.mxu0 %v975
      %1008 = vmatprep.subr.mxu0 0.0
      %1009 = vmatpush1.msra.mxu0 %v976
      %1010 = vmatprep.subr.mxu0 0.0
      %1011 = vmatpush1.msra.mxu0 0.0
      %1012 = vmatprep.subr.mxu0 0.0
      %1013 = vmatpush1.msra.mxu0 0.0
      %1014 = vmatprep.subr.mxu0 0.0
      %1015 = vmatpush1.msra.mxu0 0.0
      %1016 = vmatprep.subr.mxu0 0.0
      %1017 = vmatpush1.msra.mxu0 0.0
      %1018 = vmatprep.subr.mxu0 0.0
      %1019 = vmatpush1.msra.mxu0 0.0
      %1020 = vmatprep.subr.mxu0 0.0
      %1021 = vmatpush1.msra.mxu0 0.0
      %1022 = vmatprep.subr.mxu0 0.0
      %1023 = vmatpush1.msra.mxu0 0.0
      %1024 = vmatprep.subr.mxu0 0.0
      %1025 = vmatpush1.msra.mxu0 0.0
      %1026 = vmatprep.subr.mxu0 0.0
      %1027 = vmatpush1.msra.mxu0 0.0
      %1028 = vmatprep.subr.mxu0 0.0
      %1029 = vmatpush1.msra.mxu0 0.0
      %1030 = vmatprep.subr.mxu0 0.0
      %1031 = vmatpush1.msra.mxu0 0.0
      %1032 = vmatprep.subr.mxu0 0.0
      %1033 = vmatpush1.msra.mxu0 0.0
      %1034 = vmatprep.subr.mxu0 0.0
      %1035 = vmatpush1.msra.mxu0 0.0
      %1036 = vmatprep.subr.mxu0 0.0
      %1037 = vmatpush1.msra.mxu0 0.0
      %1038 = vmatprep.subr.mxu0 0.0
      %1039 = vmatpush1.msra.mxu0 0.0
      %1040 = vmatprep.subr.mxu0 0.0
      %1041 = vmatpush1.msra.mxu0 0.0
      %1042 = vmatprep.mubr.f32.mxu0 0.0
      %1043 = vmatmul.mubr.f32.gmra.mrb[0].mxu0 %v960
      %v1044 = vpop.f32.mrb[0].mxu0
      %v1045 = vadd.f32 %v977, %v1044
      %v1046 = vpop.f32.mrb[0].mxu0
      %1047 = vdwg.mxu0
      %v1048 = vmax.f32 %v1045, 0.0
      %v1049 = vld [vmem:[%s14] sm:$0xff]
      %v1050 = vld [vmem:[%s14 + $0x8] sm:$0xff]
      %v1051 = vld [vmem:[%s14 + $0x10] sm:$0xff]
      %v1052 = vld [vmem:[%s14 + $0x18] sm:$0xff]
      %v1053 = vld [vmem:[%s14 + $0x20] sm:$0xff]
      %v1054 = vld [vmem:[%s14 + $0x28] sm:$0xff]
      %v1055 = vld [vmem:[%s14 + $0x30] sm:$0xff]
      %v1056 = vld [vmem:[%s14 + $0x38] sm:$0xff]
      %v1057 = vld [vmem:[%s14 + $0x40] sm:$0xff]
      %v1058 = vld [vmem:[%s14 + $0x48] sm:$0xff]
      %v1059 = vld [vmem:[%s14 + $0x50] sm:$0xff]
      %v1060 = vld [vmem:[%s14 + $0x58] sm:$0xff]
      %v1061 = vld [vmem:[%s14 + $0x60] sm:$0xff]
      %v1062 = vld [vmem:[%s14 + $0x68] sm:$0xff]
      %v1063 = vld [vmem:[%s14 + $0x70] sm:$0xff]
      %v1064 = vld [vmem:[%s14 + $0x78] sm:$0xff]
      %v1065 = vld [vmem:[#allocation23] sm:$0x1]
      %1066 = vmatprep.subr.mxu0 0.0
      %1067 = vmatpush1.msra.mxu0 %v1049
      %1068 = vmatprep.subr.mxu0 0.0
      %1069 = vmatpush1.msra.mxu0 %v1050
      %1070 = vmatprep.subr.mxu0 0.0
      %1071 = vmatpush1.msra.mxu0 %v1051
      %1072 = vmatprep.subr.mxu0 0.0
      %1073 = vmatpush1.msra.mxu0 %v1052
      %1074 = vmatprep.subr.mxu0 0.0
      %1075 = vmatpush1.msra.mxu0 %v1053
      %1076 = vmatprep.subr.mxu0 0.0
      %1077 = vmatpush1.msra.mxu0 %v1054
      %1078 = vmatprep.subr.mxu0 0.0
      %1079 = vmatpush1.msra.mxu0 %v1055
      %1080 = vmatprep.subr.mxu0 0.0
      %1081 = vmatpush1.msra.mxu0 %v1056
      %1082 = vmatprep.subr.mxu0 0.0
      %1083 = vmatpush1.msra.mxu0 %v1057
      %1084 = vmatprep.subr.mxu0 0.0
      %1085 = vmatpush1.msra.mxu0 %v1058
      %1086 = vmatprep.subr.mxu0 0.0
      %1087 = vmatpush1.msra.mxu0 %v1059
      %1088 = vmatprep.subr.mxu0 0.0
      %1089 = vmatpush1.msra.mxu0 %v1060
      %1090 = vmatprep.subr.mxu0 0.0
      %1091 = vmatpush1.msra.mxu0 %v1061
      %1092 = vmatprep.subr.mxu0 0.0
      %1093 = vmatpush1.msra.mxu0 %v1062
      %1094 = vmatprep.subr.mxu0 0.0
      %1095 = vmatpush1.msra.mxu0 %v1063
      %1096 = vmatprep.subr.mxu0 0.0
      %1097 = vmatpush1.msra.mxu0 %v1064
      %1098 = vmatprep.subr.mxu0 0.0
      %1099 = vmatpush1.msra.mxu0 0.0
      %1100 = vmatprep.subr.mxu0 0.0
      %1101 = vmatpush1.msra.mxu0 0.0
      %1102 = vmatprep.subr.mxu0 0.0
      %1103 = vmatpush1.msra.mxu0 0.0
      %1104 = vmatprep.subr.mxu0 0.0
      %1105 = vmatpush1.msra.mxu0 0.0
      %1106 = vmatprep.subr.mxu0 0.0
      %1107 = vmatpush1.msra.mxu0 0.0
      %1108 = vmatprep.subr.mxu0 0.0
      %1109 = vmatpush1.msra.mxu0 0.0
      %1110 = vmatprep.subr.mxu0 0.0
      %1111 = vmatpush1.msra.mxu0 0.0
      %1112 = vmatprep.subr.mxu0 0.0
      %1113 = vmatpush1.msra.mxu0 0.0
      %1114 = vmatprep.subr.mxu0 0.0
      %1115 = vmatpush1.msra.mxu0 0.0
      %1116 = vmatprep.subr.mxu0 0.0
      %1117 = vmatpush1.msra.mxu0 0.0
      %1118 = vmatprep.subr.mxu0 0.0
      %1119 = vmatpush1.msra.mxu0 0.0
      %1120 = vmatprep.subr.mxu0 0.0
      %1121 = vmatpush1.msra.mxu0 0.0
      %1122 = vmatprep.subr.mxu0 0.0
      %1123 = vmatpush1.msra.mxu0 0.0
      %1124 = vmatprep.subr.mxu0 0.0
      %1125 = vmatpush1.msra.mxu0 0.0
      %1126 = vmatprep.subr.mxu0 0.0
      %1127 = vmatpush1.msra.mxu0 0.0
      %1128 = vmatprep.subr.mxu0 0.0
      %1129 = vmatpush1.msra.mxu0 0.0
      %1130 = vmatprep.mubr.f32.mxu0 0.0
      %1131 = vmatmul.mubr.f32.gmra.mrb[0].mxu0 %v1048
      %v1132 = vpop.f32.mrb[0].mxu0
      %v1133 = vadd.f32 %v1065, %v1132
      %v1134 = vpop.f32.mrb[0].mxu0
      %1135 = vdwg.mxu0
      %v1136 = vld [vmem:[%s18] sm:$0xff]
      %v1137 = vld [vmem:[%s18 + $0x8] sm:$0xff]
      %v1138 = vld [vmem:[%s18 + $0x10] sm:$0xff]
      %v1139 = vld [vmem:[%s18 + $0x18] sm:$0xff]
      %v1140 = vld [vmem:[%s18 + $0x20] sm:$0xff]
      %v1141 = vld [vmem:[%s18 + $0x28] sm:$0xff]
      %v1142 = vld [vmem:[%s18 + $0x30] sm:$0xff]
      %v1143 = vld [vmem:[%s18 + $0x38] sm:$0xff]
      %v1144 = vld [vmem:[%s18 + $0x40] sm:$0xff]
      %v1145 = vld [vmem:[%s18 + $0x48] sm:$0xff]
      %v1146 = vld [vmem:[%s18 + $0x50] sm:$0xff]
      %v1147 = vld [vmem:[%s18 + $0x58] sm:$0xff]
      %v1148 = vld [vmem:[%s18 + $0x60] sm:$0xff]
      %v1149 = vld [vmem:[%s18 + $0x68] sm:$0xff]
      %v1150 = vld [vmem:[%s18 + $0x70] sm:$0xff]
      %v1151 = vld [vmem:[%s18 + $0x78] sm:$0xff]
      %v1152 = vld [vmem:[%s19] sm:$0x1]
      %1153 = vmatprep.subr.mxu0 0.0
      %1154 = vmatpush1.msra.mxu0 %v1136
      %1155 = vmatprep.subr.mxu0 0.0
      %1156 = vmatpush1.msra.mxu0 %v1137
      %1157 = vmatprep.subr.mxu0 0.0
      %1158 = vmatpush1.msra.mxu0 %v1138
      %1159 = vmatprep.subr.mxu0 0.0
      %1160 = vmatpush1.msra.mxu0 %v1139
      %1161 = vmatprep.subr.mxu0 0.0
      %1162 = vmatpush1.msra.mxu0 %v1140
      %1163 = vmatprep.subr.mxu0 0.0
      %1164 = vmatpush1.msra.mxu0 %v1141
      %1165 = vmatprep.subr.mxu0 0.0
      %1166 = vmatpush1.msra.mxu0 %v1142
      %1167 = vmatprep.subr.mxu0 0.0
      %1168 = vmatpush1.msra.mxu0 %v1143
      %1169 = vmatprep.subr.mxu0 0.0
      %1170 = vmatpush1.msra.mxu0 %v1144
      %1171 = vmatprep.subr.mxu0 0.0
      %1172 = vmatpush1.msra.mxu0 %v1145
      %1173 = vmatprep.subr.mxu0 0.0
      %1174 = vmatpush1.msra.mxu0 %v1146
      %1175 = vmatprep.subr.mxu0 0.0
      %1176 = vmatpush1.msra.mxu0 %v1147
      %1177 = vmatprep.subr.mxu0 0.0
      %1178 = vmatpush1.msra.mxu0 %v1148
      %1179 = vmatprep.subr.mxu0 0.0
      %1180 = vmatpush1.msra.mxu0 %v1149
      %1181 = vmatprep.subr.mxu0 0.0
      %1182 = vmatpush1.msra.mxu0 %v1150
      %1183 = vmatprep.subr.mxu0 0.0
      %1184 = vmatpush1.msra.mxu0 %v1151
      %1185 = vmatprep.subr.mxu0 0.0
      %1186 = vmatpush1.msra.mxu0 0.0
      %1187 = vmatprep.subr.mxu0 0.0
      %1188 = vmatpush1.msra.mxu0 0.0
      %1189 = vmatprep.subr.mxu0 0.0
      %1190 = vmatpush1.msra.mxu0 0.0
      %1191 = vmatprep.subr.mxu0 0.0
      %1192 = vmatpush1.msra.mxu0 0.0
      %1193 = vmatprep.subr.mxu0 0.0
      %1194 = vmatpush1.msra.mxu0 0.0
      %1195 = vmatprep.subr.mxu0 0.0
      %1196 = vmatpush1.msra.mxu0 0.0
      %1197 = vmatprep.subr.mxu0 0.0
      %1198 = vmatpush1.msra.mxu0 0.0
      %1199 = vmatprep.subr.mxu0 0.0
      %1200 = vmatpush1.msra.mxu0 0.0
      %1201 = vmatprep.subr.mxu0 0.0
      %1202 = vmatpush1.msra.mxu0 0.0
      %1203 = vmatprep.subr.mxu0 0.0
      %1204 = vmatpush1.msra.mxu0 0.0
      %1205 = vmatprep.subr.mxu0 0.0
      %1206 = vmatpush1.msra.mxu0 0.0
      %1207 = vmatprep.subr.mxu0 0.0
      %1208 = vmatpush1.msra.mxu0 0.0
      %1209 = vmatprep.subr.mxu0 0.0
      %1210 = vmatpush1.msra.mxu0 0.0
      %1211 = vmatprep.subr.mxu0 0.0
      %1212 = vmatpush1.msra.mxu0 0.0
      %1213 = vmatprep.subr.mxu0 0.0
      %1214 = vmatpush1.msra.mxu0 0.0
      %1215 = vmatprep.subr.mxu0 0.0
      %1216 = vmatpush1.msra.mxu0 0.0
      %1217 = vmatprep.mubr.f32.mxu0 0.0
      %1218 = vmatmul.mubr.f32.gmra.mrb[0].mxu0 %v1048
      %v1219 = vpop.f32.mrb[0].mxu0
      %v1220 = vadd.f32 %v1152, %v1219
      %v1221 = vpop.f32.mrb[0].mxu0
      %1222 = vdwg.mxu0
      %v1223 = vld [vmem:[%s16] sm:$0xff]
      %v1224 = vld [vmem:[%s16 + $0x8] sm:$0xff]
      %v1225 = vld [vmem:[%s16 + $0x10] sm:$0xff]
      %v1226 = vld [vmem:[%s16 + $0x18] sm:$0xff]
      %v1227 = vld [vmem:[%s16 + $0x20] sm:$0xff]
      %v1228 = vld [vmem:[%s16 + $0x28] sm:$0xff]
      %v1229 = vld [vmem:[%s16 + $0x30] sm:$0xff]
      %v1230 = vld [vmem:[%s16 + $0x38] sm:$0xff]
      %v1231 = vld [vmem:[%s16 + $0x40] sm:$0xff]
      %v1232 = vld [vmem:[%s16 + $0x48] sm:$0xff]
      %v1233 = vld [vmem:[%s16 + $0x50] sm:$0xff]
      %v1234 = vld [vmem:[%s16 + $0x58] sm:$0xff]
      %v1235 = vld [vmem:[%s16 + $0x60] sm:$0xff]
      %v1236 = vld [vmem:[%s16 + $0x68] sm:$0xff]
      %v1237 = vld [vmem:[%s16 + $0x70] sm:$0xff]
      %v1238 = vld [vmem:[%s16 + $0x78] sm:$0xff]
      %v1239 = vld [vmem:[#allocation25] sm:$0x1]
      %1240 = vmatprep.subr.mxu0 0.0
      %1241 = vmatpush1.msra.mxu0 %v1223
      %1242 = vmatprep.subr.mxu0 0.0
      %1243 = vmatpush1.msra.mxu0 %v1224
      %1244 = vmatprep.subr.mxu0 0.0
      %1245 = vmatpush1.msra.mxu0 %v1225
      %1246 = vmatprep.subr.mxu0 0.0
      %1247 = vmatpush1.msra.mxu0 %v1226
      %1248 = vmatprep.subr.mxu0 0.0
      %1249 = vmatpush1.msra.mxu0 %v1227
      %1250 = vmatprep.subr.mxu0 0.0
      %1251 = vmatpush1.msra.mxu0 %v1228
      %1252 = vmatprep.subr.mxu0 0.0
      %1253 = vmatpush1.msra.mxu0 %v1229
      %1254 = vmatprep.subr.mxu0 0.0
      %1255 = vmatpush1.msra.mxu0 %v1230
      %1256 = vmatprep.subr.mxu0 0.0
      %1257 = vmatpush1.msra.mxu0 %v1231
      %1258 = vmatprep.subr.mxu0 0.0
      %1259 = vmatpush1.msra.mxu0 %v1232
      %1260 = vmatprep.subr.mxu0 0.0
      %1261 = vmatpush1.msra.mxu0 %v1233
      %1262 = vmatprep.subr.mxu0 0.0
      %1263 = vmatpush1.msra.mxu0 %v1234
      %1264 = vmatprep.subr.mxu0 0.0
      %1265 = vmatpush1.msra.mxu0 %v1235
      %1266 = vmatprep.subr.mxu0 0.0
      %1267 = vmatpush1.msra.mxu0 %v1236
      %1268 = vmatprep.subr.mxu0 0.0
      %1269 = vmatpush1.msra.mxu0 %v1237
      %1270 = vmatprep.subr.mxu0 0.0
      %1271 = vmatpush1.msra.mxu0 %v1238
      %1272 = vmatprep.subr.mxu0 0.0
      %1273 = vmatpush1.msra.mxu0 0.0
      %1274 = vmatprep.subr.mxu0 0.0
      %1275 = vmatpush1.msra.mxu0 0.0
      %1276 = vmatprep.subr.mxu0 0.0
      %1277 = vmatpush1.msra.mxu0 0.0
      %1278 = vmatprep.subr.mxu0 0.0
      %1279 = vmatpush1.msra.mxu0 0.0
      %1280 = vmatprep.subr.mxu0 0.0
      %1281 = vmatpush1.msra.mxu0 0.0
      %1282 = vmatprep.subr.mxu0 0.0
      %1283 = vmatpush1.msra.mxu0 0.0
      %1284 = vmatprep.subr.mxu0 0.0
      %1285 = vmatpush1.msra.mxu0 0.0
      %1286 = vmatprep.subr.mxu0 0.0
      %1287 = vmatpush1.msra.mxu0 0.0
      %1288 = vmatprep.subr.mxu0 0.0
      %1289 = vmatpush1.msra.mxu0 0.0
      %1290 = vmatprep.subr.mxu0 0.0
      %1291 = vmatpush1.msra.mxu0 0.0
      %1292 = vmatprep.subr.mxu0 0.0
      %1293 = vmatpush1.msra.mxu0 0.0
      %1294 = vmatprep.subr.mxu0 0.0
      %1295 = vmatpush1.msra.mxu0 0.0
      %1296 = vmatprep.subr.mxu0 0.0
      %1297 = vmatpush1.msra.mxu0 0.0
      %1298 = vmatprep.subr.mxu0 0.0
      %1299 = vmatpush1.msra.mxu0 0.0
      %1300 = vmatprep.subr.mxu0 0.0
      %1301 = vmatpush1.msra.mxu0 0.0
      %1302 = vmatprep.subr.mxu0 0.0
      %1303 = vmatpush1.msra.mxu0 0.0
      %1304 = vmatprep.mubr.f32.mxu0 0.0
      %1305 = vmatmul.mubr.f32.gmra.mrb[0].mxu0 %v1048
      %v1306 = vpop.f32.mrb[0].mxu0
      %v1307 = vadd.f32 %v1239, %v1306
      %v1308 = vpop.f32.mrb[0].mxu0
      %1309 = vdwg.mxu0
      %v1310 = vmul.f32 %v1307, 0.5
      %v1311 = vmul.f32 %v1310, 1.442695
      %v1312 = vpow.pop %v1311
      %v1313 = vld [vmem:[%s20] sm:$0xff]
      %v1314 = vld [vmem:[%s20 + $0x8] sm:$0xff]
      %v1315 = vld [vmem:[%s20 + $0x10] sm:$0xff]
      %v1316 = vld [vmem:[%s20 + $0x18] sm:$0xff]
      %v1317 = vld [vmem:[%s20 + $0x20] sm:$0xff]
      %v1318 = vld [vmem:[%s20 + $0x28] sm:$0xff]
      %v1319 = vld [vmem:[%s20 + $0x30] sm:$0xff]
      %v1320 = vld [vmem:[%s20 + $0x38] sm:$0xff]
      %v1321 = vld [vmem:[%s20 + $0x40] sm:$0xff]
      %v1322 = vld [vmem:[%s20 + $0x48] sm:$0xff]
      %v1323 = vld [vmem:[%s20 + $0x50] sm:$0xff]
      %v1324 = vld [vmem:[%s20 + $0x58] sm:$0xff]
      %v1325 = vld [vmem:[%s20 + $0x60] sm:$0xff]
      %v1326 = vld [vmem:[%s20 + $0x68] sm:$0xff]
      %v1327 = vld [vmem:[%s20 + $0x70] sm:$0xff]
      %v1328 = vld [vmem:[%s20 + $0x78] sm:$0xff]
      %v1329 = vld [vmem:[%s21] sm:$0x1]
      %1330 = vmatprep.subr.mxu0 0.0
      %1331 = vmatpush1.msra.mxu0 %v1313
      %1332 = vmatprep.subr.mxu0 0.0
      %1333 = vmatpush1.msra.mxu0 %v1314
      %1334 = vmatprep.subr.mxu0 0.0
      %1335 = vmatpush1.msra.mxu0 %v1315
      %1336 = vmatprep.subr.mxu0 0.0
      %1337 = vmatpush1.msra.mxu0 %v1316
      %1338 = vmatprep.subr.mxu0 0.0
      %1339 = vmatpush1.msra.mxu0 %v1317
      %1340 = vmatprep.subr.mxu0 0.0
      %1341 = vmatpush1.msra.mxu0 %v1318
      %1342 = vmatprep.subr.mxu0 0.0
      %1343 = vmatpush1.msra.mxu0 %v1319
      %1344 = vmatprep.subr.mxu0 0.0
      %1345 = vmatpush1.msra.mxu0 %v1320
      %1346 = vmatprep.subr.mxu0 0.0
      %1347 = vmatpush1.msra.mxu0 %v1321
      %1348 = vmatprep.subr.mxu0 0.0
      %1349 = vmatpush1.msra.mxu0 %v1322
      %1350 = vmatprep.subr.mxu0 0.0
      %1351 = vmatpush1.msra.mxu0 %v1323
      %1352 = vmatprep.subr.mxu0 0.0
      %1353 = vmatpush1.msra.mxu0 %v1324
      %1354 = vmatprep.subr.mxu0 0.0
      %1355 = vmatpush1.msra.mxu0 %v1325
      %1356 = vmatprep.subr.mxu0 0.0
      %1357 = vmatpush1.msra.mxu0 %v1326
      %1358 = vmatprep.subr.mxu0 0.0
      %1359 = vmatpush1.msra.mxu0 %v1327
      %1360 = vmatprep.subr.mxu0 0.0
      %1361 = vmatpush1.msra.mxu0 %v1328
      %1362 = vmatprep.subr.mxu0 0.0
      %1363 = vmatpush1.msra.mxu0 0.0
      %1364 = vmatprep.subr.mxu0 0.0
      %1365 = vmatpush1.msra.mxu0 0.0
      %1366 = vmatprep.subr.mxu0 0.0
      %1367 = vmatpush1.msra.mxu0 0.0
      %1368 = vmatprep.subr.mxu0 0.0
      %1369 = vmatpush1.msra.mxu0 0.0
      %1370 = vmatprep.subr.mxu0 0.0
      %1371 = vmatpush1.msra.mxu0 0.0
      %1372 = vmatprep.subr.mxu0 0.0
      %1373 = vmatpush1.msra.mxu0 0.0
      %1374 = vmatprep.subr.mxu0 0.0
      %1375 = vmatpush1.msra.mxu0 0.0
      %1376 = vmatprep.subr.mxu0 0.0
      %1377 = vmatpush1.msra.mxu0 0.0
      %1378 = vmatprep.subr.mxu0 0.0
      %1379 = vmatpush1.msra.mxu0 0.0
      %1380 = vmatprep.subr.mxu0 0.0
      %1381 = vmatpush1.msra.mxu0 0.0
      %1382 = vmatprep.subr.mxu0 0.0
      %1383 = vmatpush1.msra.mxu0 0.0
      %1384 = vmatprep.subr.mxu0 0.0
      %1385 = vmatpush1.msra.mxu0 0.0
      %1386 = vmatprep.subr.mxu0 0.0
      %1387 = vmatpush1.msra.mxu0 0.0
      %1388 = vmatprep.subr.mxu0 0.0
      %1389 = vmatpush1.msra.mxu0 0.0
      %1390 = vmatprep.subr.mxu0 0.0
      %1391 = vmatpush1.msra.mxu0 0.0
      %1392 = vmatprep.subr.mxu0 0.0
      %1393 = vmatpush1.msra.mxu0 0.0
      %1394 = vmatprep.mubr.f32.mxu0 0.0
      %1395 = vmatmul.mubr.f32.gmra.mrb[0].mxu0 %v1048
      %v1396 = vpop.f32.mrb[0].mxu0
      %v1397 = vadd.f32 %v1329, %v1396
      %v1398 = vpop.f32.mrb[0].mxu0
      %1399 = vdwg.mxu0
      %v1400 = vmul.f32 %v1397, 0.5
      %v1401 = vmul.f32 %v1400, 1.442695
      %v1402 = vpow.pop %v1401
      %v1403 = vlaneseq
      %v1404 = vshrl.u32 %v1403, 7
      %v1405 = vlaneseq
      %v1406 = vand.u32 %v1405, 127
      %vm1407 = vcmp.eq.s32.totalorder %v1404, %v1406
      %v1408 = vsel %vm1407, 1, 0
      %v1409 = vcvt.s32.f32 %v1408
      %v1410 = vadd.s32 %v1404, 8
      %vm1411 = vcmp.eq.s32.totalorder %v1410, %v1406
      %v1412 = vsel %vm1411, 1, 0
      %v1413 = vcvt.s32.f32 %v1412
      %v1414 = vlaneseq
      %v1415 = vshrl.u32 %v1414, 7
      %v1416 = vsub.s32 0, %v1415
      %v1417 = vrot.slane %v1312, %v1416
      %v1418 = vmul.f32 %v1409, %v1417
      %v1419 = vld [vmem:[#allocation13] sm:$0xff]
      %vm1420 = vcmask 64512
      %v1422 = vsel %vm1420, %v1418, 0
      %1424 = vmatprep.subr.mxu0 0.0
      %1425 = vmatpush1.msra.mxu0 %v1419
      %1426 = vmatprep.subr.mxu0 0.0
      %1427 = vmatpush1.msra.mxu0 0.0
      %1428 = vmatprep.subr.mxu0 0.0
      %1429 = vmatpush1.msra.mxu0 0.0
      %1430 = vmatprep.subr.mxu0 0.0
      %1431 = vmatpush1.msra.mxu0 0.0
      %1432 = vmatprep.subr.mxu0 0.0
      %1433 = vmatpush1.msra.mxu0 0.0
      %1434 = vmatprep.subr.mxu0 0.0
      %1435 = vmatpush1.msra.mxu0 0.0
      %1436 = vmatprep.subr.mxu0 0.0
      %1437 = vmatpush1.msra.mxu0 0.0
      %1438 = vmatprep.subr.mxu0 0.0
      %1439 = vmatpush1.msra.mxu0 0.0
      %1440 = vmatprep.subr.mxu0 0.0
      %1441 = vmatpush1.msra.mxu0 0.0
      %1442 = vmatprep.subr.mxu0 0.0
      %1443 = vmatpush1.msra.mxu0 0.0
      %1444 = vmatprep.subr.mxu0 0.0
      %1445 = vmatpush1.msra.mxu0 0.0
      %1446 = vmatprep.subr.mxu0 0.0
      %1447 = vmatpush1.msra.mxu0 0.0
      %1448 = vmatprep.subr.mxu0 0.0
      %1449 = vmatpush1.msra.mxu0 0.0
      %1450 = vmatprep.subr.mxu0 0.0
      %1451 = vmatpush1.msra.mxu0 0.0
      %1452 = vmatprep.subr.mxu0 0.0
      %1453 = vmatpush1.msra.mxu0 0.0
      %1454 = vmatprep.subr.mxu0 0.0
      %1455 = vmatpush1.msra.mxu0 0.0
      %1456 = vmatprep.subr.mxu0 0.0
      %1457 = vmatpush1.msra.mxu0 0.0
      %1458 = vmatprep.subr.mxu0 0.0
      %1459 = vmatpush1.msra.mxu0 0.0
      %1460 = vmatprep.subr.mxu0 0.0
      %1461 = vmatpush1.msra.mxu0 0.0
      %1462 = vmatprep.subr.mxu0 0.0
      %1463 = vmatpush1.msra.mxu0 0.0
      %1464 = vmatprep.subr.mxu0 0.0
      %1465 = vmatpush1.msra.mxu0 0.0
      %1466 = vmatprep.subr.mxu0 0.0
      %1467 = vmatpush1.msra.mxu0 0.0
      %1468 = vmatprep.subr.mxu0 0.0
      %1469 = vmatpush1.msra.mxu0 0.0
      %1470 = vmatprep.subr.mxu0 0.0
      %1471 = vmatpush1.msra.mxu0 0.0
      %1472 = vmatprep.subr.mxu0 0.0
      %1473 = vmatpush1.msra.mxu0 0.0
      %1474 = vmatprep.subr.mxu0 0.0
      %1475 = vmatpush1.msra.mxu0 0.0
      %1476 = vmatprep.subr.mxu0 0.0
      %1477 = vmatpush1.msra.mxu0 0.0
      %1478 = vmatprep.subr.mxu0 0.0
      %1479 = vmatpush1.msra.mxu0 0.0
      %1480 = vmatprep.subr.mxu0 0.0
      %1481 = vmatpush1.msra.mxu0 0.0
      %1482 = vmatprep.subr.mxu0 0.0
      %1483 = vmatpush1.msra.mxu0 0.0
      %1484 = vmatprep.subr.mxu0 0.0
      %1485 = vmatpush1.msra.mxu0 0.0
      %1486 = vmatprep.subr.mxu0 0.0
      %1487 = vmatpush1.msra.mxu0 0.0
      %1488 = vmatprep.mubr.f32.mxu0 0.0
      %1489 = vmatmul.mubr.f32.gmra.mrb[0].mxu0 %v1422
      %v1490 = vpop.f32.mrb[0].mxu0
      %v1491 = vadd.f32 0.0, %v1490
      %v1492 = vpop.f32.mrb[0].mxu0
      %1493 = vdwg.mxu0
      %v1494 = vpack.c.bf16 %v1491, %v1491
      %1495 = vst [vmem:[#allocation2] sm:$0xf] %v1494
      %v1496 = vlaneseq
      %v1497 = vshrl.u32 %v1496, 7
      %v1498 = vsub.s32 0, %v1497
      %v1499 = vrot.slane %v1402, %v1498
      %v1500 = vmul.f32 %v1409, %v1499
      %v1501 = vmul.f32 %v1413, %v1499
      %v1502 = vld [vmem:[%s5] sm:$0xff]
      %v1503 = vld [vmem:[%s5 + $0x8] sm:$0xff]
      %vm1504 = vcmask 130048
      %v1506 = vsel %vm1504, %v1500, 0
      %v1509 = vsel %vm1504, %v1501, 0
      %1511 = vmatprep.subr.mxu0 0.0
      %1512 = vmatpush1.msra.mxu0 %v1502
      %1513 = vmatprep.subr.mxu0 0.0
      %1514 = vmatpush1.msra.mxu0 %v1503
      %1515 = vmatprep.subr.mxu0 0.0
      %1516 = vmatpush1.msra.mxu0 0.0
      %1517 = vmatprep.subr.mxu0 0.0
      %1518 = vmatpush1.msra.mxu0 0.0
      %1519 = vmatprep.subr.mxu0 0.0
      %1520 = vmatpush1.msra.mxu0 0.0
      %1521 = vmatprep.subr.mxu0 0.0
      %1522 = vmatpush1.msra.mxu0 0.0
      %1523 = vmatprep.subr.mxu0 0.0
      %1524 = vmatpush1.msra.mxu0 0.0
      %1525 = vmatprep.subr.mxu0 0.0
      %1526 = vmatpush1.msra.mxu0 0.0
      %1527 = vmatprep.subr.mxu0 0.0
      %1528 = vmatpush1.msra.mxu0 0.0
      %1529 = vmatprep.subr.mxu0 0.0
      %1530 = vmatpush1.msra.mxu0 0.0
      %1531 = vmatprep.subr.mxu0 0.0
      %1532 = vmatpush1.msra.mxu0 0.0
      %1533 = vmatprep.subr.mxu0 0.0
      %1534 = vmatpush1.msra.mxu0 0.0
      %1535 = vmatprep.subr.mxu0 0.0
      %1536 = vmatpush1.msra.mxu0 0.0
      %1537 = vmatprep.subr.mxu0 0.0
      %1538 = vmatpush1.msra.mxu0 0.0
      %1539 = vmatprep.subr.mxu0 0.0
      %1540 = vmatpush1.msra.mxu0 0.0
      %1541 = vmatprep.subr.mxu0 0.0
      %1542 = vmatpush1.msra.mxu0 0.0
      %1543 = vmatprep.subr.mxu0 0.0
      %1544 = vmatpush1.msra.mxu0 0.0
      %1545 = vmatprep.subr.mxu0 0.0
      %1546 = vmatpush1.msra.mxu0 0.0
      %1547 = vmatprep.subr.mxu0 0.0
      %1548 = vmatpush1.msra.mxu0 0.0
      %1549 = vmatprep.subr.mxu0 0.0
      %1550 = vmatpush1.msra.mxu0 0.0
      %1551 = vmatprep.subr.mxu0 0.0
      %1552 = vmatpush1.msra.mxu0 0.0
      %1553 = vmatprep.subr.mxu0 0.0
      %1554 = vmatpush1.msra.mxu0 0.0
      %1555 = vmatprep.subr.mxu0 0.0
      %1556 = vmatpush1.msra.mxu0 0.0
      %1557 = vmatprep.subr.mxu0 0.0
      %1558 = vmatpush1.msra.mxu0 0.0
      %1559 = vmatprep.subr.mxu0 0.0
      %1560 = vmatpush1.msra.mxu0 0.0
      %1561 = vmatprep.subr.mxu0 0.0
      %1562 = vmatpush1.msra.mxu0 0.0
      %1563 = vmatprep.subr.mxu0 0.0
      %1564 = vmatpush1.msra.mxu0 0.0
      %1565 = vmatprep.subr.mxu0 0.0
      %1566 = vmatpush1.msra.mxu0 0.0
      %1567 = vmatprep.subr.mxu0 0.0
      %1568 = vmatpush1.msra.mxu0 0.0
      %1569 = vmatprep.subr.mxu0 0.0
      %1570 = vmatpush1.msra.mxu0 0.0
      %1571 = vmatprep.subr.mxu0 0.0
      %1572 = vmatpush1.msra.mxu0 0.0
      %1573 = vmatprep.subr.mxu0 0.0
      %1574 = vmatpush1.msra.mxu0 0.0
      %1575 = vmatprep.mubr.f32.mxu0 0.0
      %1576 = vmatmul.mubr.f32.gmra.mrb[0].mxu0 %v1506
      %v1577 = vpop.f32.mrb[0].mxu0
      %v1578 = vadd.f32 0.0, %v1577
      %v1579 = vpop.f32.mrb[0].mxu0
      %1580 = vmatprep.mubr.f32.mxu0 0.0
      %1581 = vmatmul.mubr.f32.gmra.mrb[0].mxu0 %v1509
      %v1582 = vpop.f32.mrb[0].mxu0
      %v1583 = vadd.f32 0.0, %v1582
      %v1584 = vpop.f32.mrb[0].mxu0
      %1585 = vdwg.mxu0
      %v1586 = vpack.c.bf16 %v1583, %v1578
      %1587 = vst [vmem:[#allocation3] sm:$0xff] %v1586
      %v1588 = vld [vmem:[#allocation14] sm:$0x1]
      %v1589 = vld [vmem:[#allocation13] sm:$0xff]
      %v1591 = vsel %vm1420, %v1133, 0
      %1593 = vmatprep.subr.mxu0 0.0
      %1594 = vmatpush1.msra.mxu0 %v1589
      %1595 = vmatprep.subr.mxu0 0.0
      %1596 = vmatpush1.msra.mxu0 0.0
      %1597 = vmatprep.subr.mxu0 0.0
      %1598 = vmatpush1.msra.mxu0 0.0
      %1599 = vmatprep.subr.mxu0 0.0
      %1600 = vmatpush1.msra.mxu0 0.0
      %1601 = vmatprep.subr.mxu0 0.0
      %1602 = vmatpush1.msra.mxu0 0.0
      %1603 = vmatprep.subr.mxu0 0.0
      %1604 = vmatpush1.msra.mxu0 0.0
      %1605 = vmatprep.subr.mxu0 0.0
      %1606 = vmatpush1.msra.mxu0 0.0
      %1607 = vmatprep.subr.mxu0 0.0
      %1608 = vmatpush1.msra.mxu0 0.0
      %1609 = vmatprep.subr.mxu0 0.0
      %1610 = vmatpush1.msra.mxu0 0.0
      %1611 = vmatprep.subr.mxu0 0.0
      %1612 = vmatpush1.msra.mxu0 0.0
      %1613 = vmatprep.subr.mxu0 0.0
      %1614 = vmatpush1.msra.mxu0 0.0
      %1615 = vmatprep.subr.mxu0 0.0
      %1616 = vmatpush1.msra.mxu0 0.0
      %1617 = vmatprep.subr.mxu0 0.0
      %1618 = vmatpush1.msra.mxu0 0.0
      %1619 = vmatprep.subr.mxu0 0.0
      %1620 = vmatpush1.msra.mxu0 0.0
      %1621 = vmatprep.subr.mxu0 0.0
      %1622 = vmatpush1.msra.mxu0 0.0
      %1623 = vmatprep.subr.mxu0 0.0
      %1624 = vmatpush1.msra.mxu0 0.0
      %1625 = vmatprep.subr.mxu0 0.0
      %1626 = vmatpush1.msra.mxu0 0.0
      %1627 = vmatprep.subr.mxu0 0.0
      %1628 = vmatpush1.msra.mxu0 0.0
      %1629 = vmatprep.subr.mxu0 0.0
      %1630 = vmatpush1.msra.mxu0 0.0
      %1631 = vmatprep.subr.mxu0 0.0
      %1632 = vmatpush1.msra.mxu0 0.0
      %1633 = vmatprep.subr.mxu0 0.0
      %1634 = vmatpush1.msra.mxu0 0.0
      %1635 = vmatprep.subr.mxu0 0.0
      %1636 = vmatpush1.msra.mxu0 0.0
      %1637 = vmatprep.subr.mxu0 0.0
      %1638 = vmatpush1.msra.mxu0 0.0
      %1639 = vmatprep.subr.mxu0 0.0
      %1640 = vmatpush1.msra.mxu0 0.0
      %1641 = vmatprep.subr.mxu0 0.0
      %1642 = vmatpush1.msra.mxu0 0.0
      %1643 = vmatprep.subr.mxu0 0.0
      %1644 = vmatpush1.msra.mxu0 0.0
      %1645 = vmatprep.subr.mxu0 0.0
      %1646 = vmatpush1.msra.mxu0 0.0
      %1647 = vmatprep.subr.mxu0 0.0
      %1648 = vmatpush1.msra.mxu0 0.0
      %1649 = vmatprep.subr.mxu0 0.0
      %1650 = vmatpush1.msra.mxu0 0.0
      %1651 = vmatprep.subr.mxu0 0.0
      %1652 = vmatpush1.msra.mxu0 0.0
      %1653 = vmatprep.subr.mxu0 0.0
      %1654 = vmatpush1.msra.mxu0 0.0
      %1655 = vmatprep.subr.mxu0 0.0
      %1656 = vmatpush1.msra.mxu0 0.0
      %1657 = vmatprep.mubr.f32.mxu0 0.0
      %1658 = vmatmul.mubr.f32.gmra.mrb[0].mxu0 %v1591
      %v1659 = vpop.f32.mrb[0].mxu0
      %v1660 = vadd.f32 0.0, %v1659
      %v1661 = vpop.f32.mrb[0].mxu0
      %1662 = vdwg.mxu0
      %v1663 = vadd.f32 %v1588, %v1660
      %v1664 = vld [vmem:[%s5] sm:$0xff]
      %v1665 = vld [vmem:[%s5 + $0x8] sm:$0xff]
      %v1667 = vsel %vm1504, %v1220, 0
      %1669 = vmatprep.subr.mxu0 0.0
      %1670 = vmatpush1.msra.mxu0 %v1664
      %1671 = vmatprep.subr.mxu0 0.0
      %1672 = vmatpush1.msra.mxu0 %v1665
      %1673 = vmatprep.subr.mxu0 0.0
      %1674 = vmatpush1.msra.mxu0 0.0
      %1675 = vmatprep.subr.mxu0 0.0
      %1676 = vmatpush1.msra.mxu0 0.0
      %1677 = vmatprep.subr.mxu0 0.0
      %1678 = vmatpush1.msra.mxu0 0.0
      %1679 = vmatprep.subr.mxu0 0.0
      %1680 = vmatpush1.msra.mxu0 0.0
      %1681 = vmatprep.subr.mxu0 0.0
      %1682 = vmatpush1.msra.mxu0 0.0
      %1683 = vmatprep.subr.mxu0 0.0
      %1684 = vmatpush1.msra.mxu0 0.0
      %1685 = vmatprep.subr.mxu0 0.0
      %1686 = vmatpush1.msra.mxu0 0.0
      %1687 = vmatprep.subr.mxu0 0.0
      %1688 = vmatpush1.msra.mxu0 0.0
      %1689 = vmatprep.subr.mxu0 0.0
      %1690 = vmatpush1.msra.mxu0 0.0
      %1691 = vmatprep.subr.mxu0 0.0
      %1692 = vmatpush1.msra.mxu0 0.0
      %1693 = vmatprep.subr.mxu0 0.0
      %1694 = vmatpush1.msra.mxu0 0.0
      %1695 = vmatprep.subr.mxu0 0.0
      %1696 = vmatpush1.msra.mxu0 0.0
      %1697 = vmatprep.subr.mxu0 0.0
      %1698 = vmatpush1.msra.mxu0 0.0
      %1699 = vmatprep.subr.mxu0 0.0
      %1700 = vmatpush1.msra.mxu0 0.0
      %1701 = vmatprep.subr.mxu0 0.0
      %1702 = vmatpush1.msra.mxu0 0.0
      %1703 = vmatprep.subr.mxu0 0.0
      %1704 = vmatpush1.msra.mxu0 0.0
      %1705 = vmatprep.subr.mxu0 0.0
      %1706 = vmatpush1.msra.mxu0 0.0
      %1707 = vmatprep.subr.mxu0 0.0
      %1708 = vmatpush1.msra.mxu0 0.0
      %1709 = vmatprep.subr.mxu0 0.0
      %1710 = vmatpush1.msra.mxu0 0.0
      %1711 = vmatprep.subr.mxu0 0.0
      %1712 = vmatpush1.msra.mxu0 0.0
      %1713 = vmatprep.subr.mxu0 0.0
      %1714 = vmatpush1.msra.mxu0 0.0
      %1715 = vmatprep.subr.mxu0 0.0
      %1716 = vmatpush1.msra.mxu0 0.0
      %1717 = vmatprep.subr.mxu0 0.0
      %1718 = vmatpush1.msra.mxu0 0.0
      %1719 = vmatprep.subr.mxu0 0.0
      %1720 = vmatpush1.msra.mxu0 0.0
      %1721 = vmatprep.subr.mxu0 0.0
      %1722 = vmatpush1.msra.mxu0 0.0
      %1723 = vmatprep.subr.mxu0 0.0
      %1724 = vmatpush1.msra.mxu0 0.0
      %1725 = vmatprep.subr.mxu0 0.0
      %1726 = vmatpush1.msra.mxu0 0.0
      %1727 = vmatprep.subr.mxu0 0.0
      %1728 = vmatpush1.msra.mxu0 0.0
      %1729 = vmatprep.subr.mxu0 0.0
      %1730 = vmatpush1.msra.mxu0 0.0
      %1731 = vmatprep.subr.mxu0 0.0
      %1732 = vmatpush1.msra.mxu0 0.0
      %1733 = vmatprep.mubr.f32.mxu0 0.0
      %1734 = vmatmul.mubr.f32.gmra.mrb[0].mxu0 %v1667
      %v1735 = vpop.f32.mrb[0].mxu0
      %v1736 = vadd.f32 0.0, %v1735
      %v1737 = vpop.f32.mrb[0].mxu0
      %1738 = vdwg.mxu0
      %v1739 = vadd.f32 %v1663, %v1736
      %1740 = vst [vmem:[#allocation4] sm:$0x1] %v1739
      %1741 = vst [vmem:[#allocation5] sm:$0x1] 0.0
    $region133: #{tpu_custom_call.1} parent=1 // pred_fallthru
      _
    %v1742 = vld [vmem:[%s227] sm:$0xf]
    %v1743 = vld [vmem:[%s227 + $0x4] sm:$0xf]
    %v1744 = vld [vmem:[#allocation2] sm:$0xf]
    %v1745 = vld [vmem:[#allocation8] sm:$0xf]
    %v1746 = vld [vmem:[#allocation8 + $0x4] sm:$0xf]
    %v1747 = vld [vmem:[#allocation3] sm:$0xff]
    %v1750 = vunpack.c.l.b16 %v1745
    %v1751 = vunpack.c.l.b16 %v1746
    %v1752 = vpack.c.b16 %v1751, %v1750
    %vm1753 = vcmask 130048
    %v1755 = vsel %vm1753, %v1752, 0
    %1757 = vmatprep.subr.bf16.mxu0 0
    %1758 = vmatpush1.bf16.msra.mxu0 %v1747
    %1759 = vmatprep.subr.bf16.mxu0 0
    %1760 = vmatpush1.bf16.msra.mxu0 0
    %1761 = vmatprep.subr.bf16.mxu0 0
    %1762 = vmatpush1.bf16.msra.mxu0 0
    %1763 = vmatprep.subr.bf16.mxu0 0
    %1764 = vmatpush1.bf16.msra.mxu0 0
    %1765 = vmatprep.subr.bf16.mxu0 0
    %1766 = vmatpush1.bf16.msra.mxu0 0
    %1767 = vmatprep.subr.bf16.mxu0 0
    %1768 = vmatpush1.bf16.msra.mxu0 0
    %1769 = vmatprep.subr.bf16.mxu0 0
    %1770 = vmatpush1.bf16.msra.mxu0 0
    %1771 = vmatprep.subr.bf16.mxu0 0
    %1772 = vmatpush1.bf16.msra.mxu0 0
    %1773 = vmatprep.subr.bf16.mxu0 0
    %1774 = vmatpush1.bf16.msra.mxu0 0
    %1775 = vmatprep.subr.bf16.mxu0 0
    %1776 = vmatpush1.bf16.msra.mxu0 0
    %1777 = vmatprep.subr.bf16.mxu0 0
    %1778 = vmatpush1.bf16.msra.mxu0 0
    %1779 = vmatprep.subr.bf16.mxu0 0
    %1780 = vmatpush1.bf16.msra.mxu0 0
    %1781 = vmatprep.subr.bf16.mxu0 0
    %1782 = vmatpush1.bf16.msra.mxu0 0
    %1783 = vmatprep.subr.bf16.mxu0 0
    %1784 = vmatpush1.bf16.msra.mxu0 0
    %1785 = vmatprep.subr.bf16.mxu0 0
    %1786 = vmatpush1.bf16.msra.mxu0 0
    %1787 = vmatprep.subr.bf16.mxu0 0
    %1788 = vmatpush1.bf16.msra.mxu0 0
    %1789 = vmatprep.mubr.bf16.mxu0 0
    %1790 = vmatmul.mubr.bf16.gmra.mrb[0].mxu0 %v1755
    %v1791 = vpop.f32.mrb[0].mxu0
    %v1792 = vadd.f32 0.0, %v1791
    %v1793 = vpop.f32.mrb[0].mxu0
    %v1794 = vpop.f32.mrb[0].mxu0
    %v1795 = vadd.f32 0.0, %v1794
    %v1796 = vpop.f32.mrb[0].mxu0
    %1797 = vdwg.mxu0
    %v1800 = vunpack.c.l.b16 %v1742
    %v1801 = vunpack.c.l.b16 %v1743
    %v1802 = vpack.c.b16 %v1801, %v1800
    %vm1803 = vcmask 64512
    %v1805 = vsel %vm1803, %v1802, 0
    %vm1807 = vcmask 1043456
    %v1809 = vsel %vm1807, %v1744, 0
    %1811 = vmatprep.subr.bf16.mxu0 0
    %1812 = vmatpush1.bf16.msra.mxu0 %v1809
    %1813 = vmatprep.subr.bf16.mxu0 0
    %1814 = vmatpush1.bf16.msra.mxu0 0
    %1815 = vmatprep.subr.bf16.mxu0 0
    %1816 = vmatpush1.bf16.msra.mxu0 0
    %1817 = vmatprep.subr.bf16.mxu0 0
    %1818 = vmatpush1.bf16.msra.mxu0 0
    %1819 = vmatprep.subr.bf16.mxu0 0
    %1820 = vmatpush1.bf16.msra.mxu0 0
    %1821 = vmatprep.subr.bf16.mxu0 0
    %1822 = vmatpush1.bf16.msra.mxu0 0
    %1823 = vmatprep.subr.bf16.mxu0 0
    %1824 = vmatpush1.bf16.msra.mxu0 0
    %1825 = vmatprep.subr.bf16.mxu0 0
    %1826 = vmatpush1.bf16.msra.mxu0 0
    %1827 = vmatprep.subr.bf16.mxu0 0
    %1828 = vmatpush1.bf16.msra.mxu0 0
    %1829 = vmatprep.subr.bf16.mxu0 0
    %1830 = vmatpush1.bf16.msra.mxu0 0
    %1831 = vmatprep.subr.bf16.mxu0 0
    %1832 = vmatpush1.bf16.msra.mxu0 0
    %1833 = vmatprep.subr.bf16.mxu0 0
    %1834 = vmatpush1.bf16.msra.mxu0 0
    %1835 = vmatprep.subr.bf16.mxu0 0
    %1836 = vmatpush1.bf16.msra.mxu0 0
    %1837 = vmatprep.subr.bf16.mxu0 0
    %1838 = vmatpush1.bf16.msra.mxu0 0
    %1839 = vmatprep.subr.bf16.mxu0 0
    %1840 = vmatpush1.bf16.msra.mxu0 0
    %1841 = vmatprep.subr.bf16.mxu0 0
    %1842 = vmatpush1.bf16.msra.mxu0 0
    %1843 = vmatprep.mubr.bf16.mxu0 0
    %1844 = vmatmul.mubr.bf16.gmra.mrb[0].mxu0 %v1805
    %v1845 = vpop.f32.mrb[0].mxu0
    %v1846 = vadd.f32 %v1792, %v1845
    %v1847 = vpop.f32.mrb[0].mxu0
    %v1848 = vpop.f32.mrb[0].mxu0
    %v1849 = vadd.f32 %v1795, %v1848
    %v1850 = vpop.f32.mrb[0].mxu0
    %1851 = vdwg.mxu0
    %v1852 = vld [vmem:[#allocation4] sm:$0x1]
    %v1854 = vlaneseq
    %v1855 = vshrl.u32 %v1854, 7
    %v1856 = vsub.s32 0, %v1855
    %v1857 = vrot.slane %v1852, %v1856
    %v1859 = vadd.f32 %v1846, %v1857
    %v1860 = vadd.f32 %v1849, %v1857
    %v1861 = vmax.f32 %v1859, 0.0
    %v1862 = vmax.f32 %v1860, 0.0
    %v1863 = vpack.c.bf16 %v1862, %v1861
    %v1864 = vld [vmem:[%s7] sm:$0xf]
    %v1865 = vld [vmem:[%s7 + $0x4] sm:$0xf]
    %v1866 = vld [vmem:[%s7 + $0x8] sm:$0xf]
    %v1867 = vld [vmem:[%s7 + $0xc] sm:$0xf]
    %v1868 = vld [vmem:[%s7 + $0x10] sm:$0xf]
    %v1869 = vld [vmem:[%s7 + $0x14] sm:$0xf]
    %v1870 = vld [vmem:[%s7 + $0x18] sm:$0xf]
    %v1871 = vld [vmem:[%s7 + $0x1c] sm:$0xf]
    %v1872 = vld [vmem:[%s7 + $0x20] sm:$0xf]
    %v1873 = vld [vmem:[%s7 + $0x24] sm:$0xf]
    %v1874 = vld [vmem:[%s7 + $0x28] sm:$0xf]
    %v1875 = vld [vmem:[%s7 + $0x2c] sm:$0xf]
    %v1876 = vld [vmem:[%s7 + $0x30] sm:$0xf]
    %v1877 = vld [vmem:[%s7 + $0x34] sm:$0xf]
    %v1878 = vld [vmem:[%s7 + $0x38] sm:$0xf]
    %v1879 = vld [vmem:[%s7 + $0x3c] sm:$0xf]
    %v1880 = vld [vmem:[#allocation16] sm:$0x1]
    %v1882 = vlaneseq
    %v1883 = vshrl.u32 %v1882, 7
    %v1884 = vsub.s32 0, %v1883
    %v1885 = vrot.slane %v1880, %v1884
    %v1903 = vunpack.c.l.b16 %v1864
    %v1904 = vunpack.c.l.b16 %v1865
    %v1905 = vunpack.c.l.b16 %v1866
    %v1906 = vunpack.c.l.b16 %v1867
    %v1907 = vunpack.c.l.b16 %v1868
    %v1908 = vunpack.c.l.b16 %v1869
    %v1909 = vunpack.c.l.b16 %v1870
    %v1910 = vunpack.c.l.b16 %v1871
    %v1911 = vunpack.c.l.b16 %v1872
    %v1912 = vunpack.c.l.b16 %v1873
    %v1913 = vunpack.c.l.b16 %v1874
    %v1914 = vunpack.c.l.b16 %v1875
    %v1915 = vunpack.c.l.b16 %v1876
    %v1916 = vunpack.c.l.b16 %v1877
    %v1917 = vunpack.c.l.b16 %v1878
    %v1918 = vunpack.c.l.b16 %v1879
    %v1919 = vpack.c.b16 %v1904, %v1903
    %v1920 = vpack.c.b16 %v1906, %v1905
    %v1921 = vpack.c.b16 %v1908, %v1907
    %v1922 = vpack.c.b16 %v1910, %v1909
    %v1923 = vpack.c.b16 %v1912, %v1911
    %v1924 = vpack.c.b16 %v1914, %v1913
    %v1925 = vpack.c.b16 %v1916, %v1915
    %v1926 = vpack.c.b16 %v1918, %v1917
    %1935 = vmatprep.subr.bf16.mxu0 0
    %1936 = vmatpush1.bf16.msra.mxu0 %v1919
    %1937 = vmatprep.subr.bf16.mxu0 0
    %1938 = vmatpush1.bf16.msra.mxu0 %v1920
    %1939 = vmatprep.subr.bf16.mxu0 0
    %1940 = vmatpush1.bf16.msra.mxu0 %v1921
    %1941 = vmatprep.subr.bf16.mxu0 0
    %1942 = vmatpush1.bf16.msra.mxu0 %v1922
    %1943 = vmatprep.subr.bf16.mxu0 0
    %1944 = vmatpush1.bf16.msra.mxu0 %v1923
    %1945 = vmatprep.subr.bf16.mxu0 0
    %1946 = vmatpush1.bf16.msra.mxu0 %v1924
    %1947 = vmatprep.subr.bf16.mxu0 0
    %1948 = vmatpush1.bf16.msra.mxu0 %v1925
    %1949 = vmatprep.subr.bf16.mxu0 0
    %1950 = vmatpush1.bf16.msra.mxu0 %v1926
    %1951 = vmatprep.subr.bf16.mxu0 0
    %1952 = vmatpush1.bf16.msra.mxu0 0
    %1953 = vmatprep.subr.bf16.mxu0 0
    %1954 = vmatpush1.bf16.msra.mxu0 0
    %1955 = vmatprep.subr.bf16.mxu0 0
    %1956 = vmatpush1.bf16.msra.mxu0 0
    %1957 = vmatprep.subr.bf16.mxu0 0
    %1958 = vmatpush1.bf16.msra.mxu0 0
    %1959 = vmatprep.subr.bf16.mxu0 0
    %1960 = vmatpush1.bf16.msra.mxu0 0
    %1961 = vmatprep.subr.bf16.mxu0 0
    %1962 = vmatpush1.bf16.msra.mxu0 0
    %1963 = vmatprep.subr.bf16.mxu0 0
    %1964 = vmatpush1.bf16.msra.mxu0 0
    %1965 = vmatprep.subr.bf16.mxu0 0
    %1966 = vmatpush1.bf16.msra.mxu0 0
    %1967 = vmatprep.mubr.bf16.mxu0 0
    %1968 = vmatmul.mubr.bf16.gmra.mrb[0].mxu0 %v1863
    %v1969 = vpop.f32.mrb[0].mxu0
    %v1970 = vadd.f32 %v1885, %v1969
    %v1971 = vpop.f32.mrb[0].mxu0
    %v1972 = vpop.f32.mrb[0].mxu0
    %v1973 = vadd.f32 %v1885, %v1972
    %v1974 = vpop.f32.mrb[0].mxu0
    %1975 = vdwg.mxu0
    %v1976 = vmax.f32 %v1970, 0.0
    %v1977 = vmax.f32 %v1973, 0.0
    %s1978 = sadd.s32 0, 0
    %s1979 = sld [smem:[#allocation7]]
    %s1980 = sadd.s32 %s1978, 1
    %s1981 = smul.u32 %s1980, 16
    %p1982 = scmp.le.s32.totalorder %s1981, %s1979
    // Predicated region
    $region134: #{tpu_custom_call.1} parent=1 // pred_check
      %p1983 = pneg %p1982
    $region135: #{tpu_custom_call.1} parent=1 // pred_check_branch
      %1985 = sbr.rel (%p1983) target = $region137
    $region136: #{tpu_custom_call.1} parent=1 // pred_region
      %v1986 = vld [vmem:[#allocation5] sm:$0x1]
      %v1987 = vadd.f32 %v1976, %v1977
      %v1988 = vrot.slane %v1987, 4
      %v1989 = vadd.f32 %v1987, %v1988
      %v1990 = vrot.slane %v1989, 2
      %v1991 = vadd.f32 %v1989, %v1990
      %v1992 = vrot.slane %v1991, 1
      %v1993 = vadd.f32 %v1991, %v1992
      %v1994 = vadd.f32 %v1986, %v1993
      %1995 = vst [vmem:[#allocation5] sm:$0x1] %v1994
    $region137: #{tpu_custom_call.1} parent=1 // pred_fallthru
      _
    %p1996 = scmp.gt.s32.totalorder %s1981, %s1979
    // Predicated region
    $region138: #{tpu_custom_call.1} parent=1 // pred_check
      %p1997 = pneg %p1996
    $region139: #{tpu_custom_call.1} parent=1 // pred_check_branch
      %1999 = sbr.rel (%p1997) target = $region141
    $region140: #{tpu_custom_call.1} parent=1 // pred_region
      %v2000 = vlaneseq
      %v2001 = vshrl.u32 %v2000, 7
      %v2002 = vadd.s32 %v2001, 8
      %s2003 = smul.u32 %s1978, 16
      %v2004 = vstv %s2003
      %v2005 = vadd.s32 %v2001, %v2004
      %v2006 = vadd.s32 %v2002, %v2004
      %v2007 = vld [vmem:[#allocation5] sm:$0x1]
      %v2008 = vstv %s1979
      %vm2009 = vcmp.lt.s32.totalorder %v2005, %v2008
      %vm2010 = vcmp.lt.s32.totalorder %v2006, %v2008
      %v2011 = vsel %vm2009, %v1976, 0.0
      %v2012 = vsel %vm2010, %v1977, 0.0
      %v2013 = vadd.f32 %v2011, %v2012
      %v2014 = vrot.slane %v2013, 4
      %v2015 = vadd.f32 %v2013, %v2014
      %v2016 = vrot.slane %v2015, 2
      %v2017 = vadd.f32 %v2015, %v2016
      %v2018 = vrot.slane %v2017, 1
      %v2019 = vadd.f32 %v2017, %v2018
      %v2020 = vadd.f32 %v2007, %v2019
      %2021 = vst [vmem:[#allocation5] sm:$0x1] %v2020
    $region141: #{tpu_custom_call.1} parent=1 // pred_fallthru
      _
    // Predicated region
    $region142: #{tpu_custom_call.1} parent=1 // pred_check
      %p2022 = pneg %p233
    $region143: #{tpu_custom_call.1} parent=1 // pred_check_branch
      %2024 = sbr.rel (%p2022) target = $region145
    $region144: #{tpu_custom_call.1} parent=1 // pred_region
      %v2025 = vld [vmem:[#allocation5] sm:$0x1]
      %v2026 = vld [vmem:[#allocation17] sm:$0xff]
      %v2027 = vld [vmem:[#allocation17 + $0x8] sm:$0xff]
      %v2028 = vld [vmem:[#allocation17 + $0x10] sm:$0xff]
      %v2029 = vld [vmem:[#allocation17 + $0x18] sm:$0xff]
      %v2030 = vld [vmem:[#allocation17 + $0x20] sm:$0xff]
      %v2031 = vld [vmem:[#allocation17 + $0x28] sm:$0xff]
      %v2032 = vld [vmem:[#allocation17 + $0x30] sm:$0xff]
      %v2033 = vld [vmem:[#allocation17 + $0x38] sm:$0xff]
      %v2034 = vld [vmem:[#allocation17 + $0x40] sm:$0xff]
      %v2035 = vld [vmem:[#allocation17 + $0x48] sm:$0xff]
      %v2036 = vld [vmem:[#allocation17 + $0x50] sm:$0xff]
      %v2037 = vld [vmem:[#allocation17 + $0x58] sm:$0xff]
      %v2038 = vld [vmem:[#allocation17 + $0x60] sm:$0xff]
      %v2039 = vld [vmem:[#allocation17 + $0x68] sm:$0xff]
      %v2040 = vld [vmem:[#allocation17 + $0x70] sm:$0xff]
      %v2041 = vld [vmem:[#allocation17 + $0x78] sm:$0xff]
      %2042 = vmatprep.subr.mxu0 0.0
      %2043 = vmatpush1.msra.mxu0 %v2026
      %2044 = vmatprep.subr.mxu0 0.0
      %2045 = vmatpush1.msra.mxu0 %v2027
      %2046 = vmatprep.subr.mxu0 0.0
      %2047 = vmatpush1.msra.mxu0 %v2028
      %2048 = vmatprep.subr.mxu0 0.0
      %2049 = vmatpush1.msra.mxu0 %v2029
      %2050 = vmatprep.subr.mxu0 0.0
      %2051 = vmatpush1.msra.mxu0 %v2030
      %2052 = vmatprep.subr.mxu0 0.0
      %2053 = vmatpush1.msra.mxu0 %v2031
      %2054 = vmatprep.subr.mxu0 0.0
      %2055 = vmatpush1.msra.mxu0 %v2032
      %2056 = vmatprep.subr.mxu0 0.0
      %2057 = vmatpush1.msra.mxu0 %v2033
      %2058 = vmatprep.subr.mxu0 0.0
      %2059 = vmatpush1.msra.mxu0 %v2034
      %2060 = vmatprep.subr.mxu0 0.0
      %2061 = vmatpush1.msra.mxu0 %v2035
      %2062 = vmatprep.subr.mxu0 0.0
      %2063 = vmatpush1.msra.mxu0 %v2036
      %2064 = vmatprep.subr.mxu0 0.0
      %2065 = vmatpush1.msra.mxu0 %v2037
      %2066 = vmatprep.subr.mxu0 0.0
      %2067 = vmatpush1.msra.mxu0 %v2038
      %2068 = vmatprep.subr.mxu0 0.0
      %2069 = vmatpush1.msra.mxu0 %v2039
      %2070 = vmatprep.subr.mxu0 0.0
      %2071 = vmatpush1.msra.mxu0 %v2040
      %2072 = vmatprep.subr.mxu0 0.0
      %2073 = vmatpush1.msra.mxu0 %v2041
      %2074 = vmatprep.subr.mxu0 0.0
      %2075 = vmatpush1.msra.mxu0 0.0
      %2076 = vmatprep.subr.mxu0 0.0
      %2077 = vmatpush1.msra.mxu0 0.0
      %2078 = vmatprep.subr.mxu0 0.0
      %2079 = vmatpush1.msra.mxu0 0.0
      %2080 = vmatprep.subr.mxu0 0.0
      %2081 = vmatpush1.msra.mxu0 0.0
      %2082 = vmatprep.subr.mxu0 0.0
      %2083 = vmatpush1.msra.mxu0 0.0
      %2084 = vmatprep.subr.mxu0 0.0
      %2085 = vmatpush1.msra.mxu0 0.0
      %2086 = vmatprep.subr.mxu0 0.0
      %2087 = vmatpush1.msra.mxu0 0.0
      %2088 = vmatprep.subr.mxu0 0.0
      %2089 = vmatpush1.msra.mxu0 0.0
      %2090 = vmatprep.subr.mxu0 0.0
      %2091 = vmatpush1.msra.mxu0 0.0
      %2092 = vmatprep.subr.mxu0 0.0
      %2093 = vmatpush1.msra.mxu0 0.0
      %2094 = vmatprep.subr.mxu0 0.0
      %2095 = vmatpush1.msra.mxu0 0.0
      %2096 = vmatprep.subr.mxu0 0.0
      %2097 = vmatpush1.msra.mxu0 0.0
      %2098 = vmatprep.subr.mxu0 0.0
      %2099 = vmatpush1.msra.mxu0 0.0
      %2100 = vmatprep.subr.mxu0 0.0
      %2101 = vmatpush1.msra.mxu0 0.0
      %2102 = vmatprep.subr.mxu0 0.0
      %2103 = vmatpush1.msra.mxu0 0.0
      %2104 = vmatprep.subr.mxu0 0.0
      %2105 = vmatpush1.msra.mxu0 0.0
      %2106 = vmatprep.mubr.f32.mxu0 0.0
      %2107 = vmatmul.mubr.f32.gmra.mrb[0].mxu0 %v2025
      %v2108 = vpop.f32.mrb[0].mxu0
      %v2109 = vadd.f32 0.0, %v2108
      %v2110 = vpop.f32.mrb[0].mxu0
      %2111 = vdwg.mxu0
      %2112 = vst [vmem:[#allocation26] sm:$0x1] %v2109
    $region145: #{tpu_custom_call.1} parent=1 // pred_fallthru
      _
    // Predicated region
    $region146: #{tpu_custom_call.1} parent=1 // pred_check
      _
    $region147: #{tpu_custom_call.1} parent=1 // pred_check_branch
      %2114 = sbr.rel (0) target = $region149
    $region148: #{tpu_custom_call.1} parent=1 // pred_region
      %s2116 = ssub.s32 16, 16
      %2117 = vsyncadd [#allocation10], %s2116
      %s2119 = sshll.u32 [#allocation26], 4
      %s2120 = int_to_ptr.vmem [resolvable:$true] %s2119
      %2122 = dma.vmem_to_hbm [thread:$0]  %s2120, 16, %s22, [#allocation10]
    $region149: #{tpu_custom_call.1} parent=1 // pred_fallthru
      _
    // Predicated region
    $region150: #{tpu_custom_call.1} parent=1 // pred_check
      _
    $region151: #{tpu_custom_call.1} parent=1 // pred_check_branch
      %2124 = sbr.rel (0) target = $region153
    $region152: #{tpu_custom_call.1} parent=1 // pred_region
      %2125 = dma.done [#allocation10], 16
    $region153: #{tpu_custom_call.1} parent=1 // pred_fallthru
      _
    %2126 = vsyncpa [#allocation9], 1
    %2127 = vsyncpa [#allocation12], 1
    %2128 = vsyncpa [#allocation15], 1
    %2129 = vsyncpa [#allocation18], 1
    %2130 = vsyncpa [#allocation21], 1
    %2131 = vsyncpa [#allocation24], 1
    %2132 = vsyncpa [#allocation10], 1

</llo_original>
